<compile_context>
chip_gen: v5e
topology: v5e:2x2
jax: 0.10.0
libtpu: 0.0.40
codegen_flags: <defaults>
</compile_context>

<pallas_src>
import math

import jax
import jax.numpy as jnp
from jax.experimental import pallas as pl
from jax.experimental.pallas import tpu as pltpu

BN_EPS = 1e-5
LANE = 128
CONV_CFG = ((5, 1), (3, 3), (3, 4), (1, 1), (1, 1))          # (kernel, dilation)
TOTAL_SHRINK = sum(d * (k - 1) for k, d in CONV_CFG)          # = 18 frames


def _round_up(v, m):
    return (v + m - 1) // m * m


# ----------------------------------------------------------------------------
# Pallas kernel: TB batch elements per grid step, whole network fused.
# ----------------------------------------------------------------------------
def _make_kernel(TB, T_pad, t_valid):
    N = TB * T_pad                       # rows of the flattened activation slab
    inv_n = 1.0 / float(t_valid)
    inv_nm1 = 1.0 / float(t_valid - 1)

    def conv_bn_relu(h, w_ref, s_ref, kernel_size, dilation):
        # Dilated Conv1d as K accumulated per-tap matmuls:
        #     acc[i] = sum_k h[i + k*d] @ W_k
        # Shifted views come from an XLU sublane roll of the whole (N, C) slab
        # (no K-wide im2col buffer, no zero-extension copy).  Rows wrapped
        # across batch-segment boundaries only land in tail rows that are
        # already invalid for this layer's output (T_pad - valid_out >= ext)
        # and are masked out before the stat pool.
        acc = jnp.dot(h.astype(jnp.bfloat16), w_ref[0],
                      preferred_element_type=jnp.float32)
        for k in range(1, kernel_size):
            hk = pltpu.roll(h, N - k * dilation, axis=0)   # == jnp.roll(h, -k*d, 0)
            acc = acc + jnp.dot(hk.astype(jnp.bfloat16), w_ref[k],
                                preferred_element_type=jnp.float32)
        return jnp.maximum(acc + s_ref[...], 0.0)

    def kernel(x_ref,
               w1, s1, w2, s2, w3, s3, w4, s4, w5, s5,   # conv stages (BN folded)
               w6m, w6s, s6, w7, s7,                     # fc6+bn6 (split), fc7+bn7
               w8, b8,                                   # final classifier (L padded)
               out_ref):

        h = x_ref[...]                                   # (N, C_in) f32
        for (w_r, s_r), (ksz, dil) in zip(
                ((w1, s1), (w2, s2), (w3, s3), (w4, s4), (w5, s5)), CONV_CFG):
            h = conv_bn_relu(h, w_r, s_r, ksz, dil)      # -> (N, M_pad) f32

        # st_pool_layer: masked two-pass mean / unbiased std over valid frames.
        m_w = h.shape[1]
        h3 = h.reshape(TB, T_pad, m_w)
        t_idx = jax.lax.broadcasted_iota(jnp.int32, (T_pad, 1), 0)[None]  # (1,T_pad,1)
        mask = (t_idx < t_valid).astype(jnp.float32)
        mean = jnp.sum(h3 * mask, axis=1) * inv_n        # (TB, M_pad)
        dev = (h3 - mean[:, None, :]) * mask
        var = jnp.sum(dev * dev, axis=1) * inv_nm1
        std = jnp.sqrt(jnp.maximum(var, 0.0))

        # fc6+bn6+relu (the [mean,std] lane concat is avoided by splitting the
        # fc6 weight), fc7+bn7+relu, final classifier (bf16 operands, f32 acc).
        z = (jnp.dot(mean.astype(jnp.bfloat16), w6m[...],
                     preferred_element_type=jnp.float32)
             + jnp.dot(std.astype(jnp.bfloat16), w6s[...],
                       preferred_element_type=jnp.float32)
             + s6[...])
        z = jnp.maximum(z, 0.0)
        z = jnp.dot(z.astype(jnp.bfloat16), w7[...],
                    preferred_element_type=jnp.float32) + s7[...]
        z = jnp.maximum(z, 0.0)
        logits = jnp.dot(z.astype(jnp.bfloat16), w8[...],
                         preferred_element_type=jnp.float32) + b8[...]
        out_ref[...] = logits[None]                      # (1, TB, L_pad)

    return kernel


def tdnn_xvector_forward(x, args, n_labels):
    """x: (B, T, C_in) float32; args: folded parameters from fold_params()."""
    B, T, C = x.shape
    t_valid = T - TOTAL_SHRINK
    assert t_valid >= 2, "need at least 20 input frames for the TDNN stack"

    T_pad = _round_up(T, 8)
    L_pad = args[-1].shape[-1]                    # classifier padded to 128 lanes
    M_pad = args[9].shape[-1]                     # conv5 / pooling width (padded)
    W_hid = args[1].shape[-1]                     # hidden width

    weight_bytes = sum(int(a.size) * a.dtype.itemsize for a in args)

    # Per-generation VMEM budget (v7x: 64 MiB per core, v5e/v6e: 128 MiB).
    try:
        vmem_cap = int(pltpu.get_tpu_info().vmem_capacity_bytes)
    except Exception:
        vmem_cap = 64 * 1024 * 1024
    budget = int(vmem_cap * 0.55)
    vmem_limit = min(int(vmem_cap * 0.85), 100 * 1024 * 1024)

    def est_vmem(tb):
        n = tb * T_pad
        act = 4 * n * (2 * M_pad + 2 * W_hid + C)      # live activation slabs (coarse)
        io = 2 * 4 * n * C + 2 * 4 * tb * L_pad        # double-buffered in/out blocks
        return act + io + 2 * weight_bytes             # weights double-buffered

    TB = min(B, 8)
    while TB > 1 and est_vmem(TB) > budget:
        TB //= 2
    # Keep >= 2 grid steps so the single "parallel" axis can shard across both
    # v7x TensorCores (no effect on v5e/v6e).
    while TB > 1 and _round_up(B, TB) // TB < 2:
        TB //= 2

    B_pad = _round_up(B, TB)
    G = B_pad // TB

    # Zero-pad batch / time and flatten to a lane-dense (B_pad*T_pad, C) slab.
    x_pad = jnp.zeros((B_pad, T_pad, C), jnp.float32).at[:B, :T, :].set(x)
    x_flat = x_pad.reshape(B_pad * T_pad, C)

    in_specs = [pl.BlockSpec((TB * T_pad, C), lambda b: (b, 0))]
    for a in args:                                # folded params, constant blocks
        in_specs.append(pl.BlockSpec(a.shape, lambda b, _r=a.ndim: (0,) * _r))
    # 3-D output block whose two minor dims equal the array dims -> always
    # tile-legal and lane-dense, regardless of TB.
    out_spec = pl.BlockSpec((1, TB, L_pad), lambda b: (b, 0, 0))

    # Advisory cost estimate for the XLA scheduler.
    flops = 0
    for w in (args[0], args[2], args[4], args[6], args[8]):      # conv (K,Cin,Cout)
        flops += 2 * B_pad * T_pad * int(w.size)
    for w in (args[10], args[11], args[13], args[15]):           # fc weights
        flops += 2 * B_pad * int(w.size)
    bytes_accessed = (int(x_flat.size) * 4 + weight_bytes + B_pad * L_pad * 4)
    cost = pl.CostEstimate(flops=int(flops),
                           transcendentals=int(B_pad * M_pad),
                           bytes_accessed=int(bytes_accessed))

    out = pl.pallas_call(
        _make_kernel(TB, T_pad, t_valid),
        out_shape=jax.ShapeDtypeStruct((G, TB, L_pad), jnp.float32),
        grid_spec=pltpu.PrefetchScalarGridSpec(
            num_scalar_prefetch=0,
            grid=(G,),
            in_specs=in_specs,
            out_specs=out_spec,
        ),
        compiler_params=pltpu.CompilerParams(
            dimension_semantics=("parallel",),
            vmem_limit_bytes=int(vmem_limit),
        ),
        cost_estimate=cost,
    )(x_flat, *args)

    return out.reshape(B_pad, L_pad)[:B, :n_labels]


# ----------------------------------------------------------------------------
# Parameter setup (glue) — deterministic init matching _initialize_weights.
# ----------------------------------------------------------------------------
def make_raw_params(key, in_dim, W, M, L):
    ks = jax.random.split(key, 8)
    p = {}

    def bn(prefix, n):
        p[prefix + "_g"] = jnp.ones((n,), jnp.float32)
        p[prefix + "_beta"] = jnp.zeros((n,), jnp.float32)
        p[prefix + "_m"] = jnp.zeros((n,), jnp.float32)
        p[prefix + "_v"] = jnp.ones((n,), jnp.float32)

    # Conv1d weights: (out, in, K), N(0, sqrt(2/(K*out))), bias = 0
    conv_cfg = [("c1", W, in_dim, 5), ("c2", W, W, 3), ("c3", W, W, 3),
                ("c4", W, W, 1), ("c5", M, W, 1)]
    for i, (name, co, ci, k) in enumerate(conv_cfg):
        p[name + "_w"] = jax.random.normal(ks[i], (co, ci, k), jnp.float32) * math.sqrt(2.0 / (k * co))
        p[name + "_b"] = jnp.zeros((co,), jnp.float32)
        bn(name, co)

    # Linear weights: (out, in), N(0, 0.01), bias = 0
    p["fc6_w"] = jax.random.normal(ks[5], (W, 2 * M), jnp.float32) * 0.01
    p["fc6_b"] = jnp.zeros((W,), jnp.float32)
    bn("bn6", W)
    p["fc7_w"] = jax.random.normal(ks[6], (W, W), jnp.float32) * 0.01
    p["fc7_b"] = jnp.zeros((W,), jnp.float32)
    bn("bn7", W)
    p["fc8_w"] = jax.random.normal(ks[7], (L, W), jnp.float32) * 0.01
    p["fc8_b"] = jnp.zeros((L,), jnp.float32)
    return p


def fold_params(p):
    """Fold inference-mode BatchNorm into the preceding conv / linear weights and
    lay them out for the kernel: conv weights as per-tap (K, C_in, C_out) bf16,
    conv5 / fc6 widths padded lane-dense, fc6 split into mean / std halves,
    final classifier bf16 with lane-dense padded output."""
    # TODO(synk): PyTorch BatchNorm in train() mode uses batch statistics; this
    # kernel implements inference-mode BN (running stats), the usual forward.

    def bn_scale_shift(prefix, bias):
        scale = p[prefix + "_g"] / jnp.sqrt(p[prefix + "_v"] + BN_EPS)
        shift = (bias - p[prefix + "_m"]) * scale + p[prefix + "_beta"]
        return scale, shift

    def fold_conv(name, out_pad=None):
        scale, shift = bn_scale_shift(name, p[name + "_b"])
        w = p[name + "_w"] * scale[:, None, None]                 # (out, in, K)
        w_kio = jnp.transpose(w, (2, 1, 0))                       # (K, in, out)
        s = shift.reshape(1, -1)
        if out_pad is not None and out_pad > w_kio.shape[-1]:
            K, ci, co = w_kio.shape
            w_kio = jnp.zeros((K, ci, out_pad), w_kio.dtype).at[:, :, :co].set(w_kio)
            s = jnp.zeros((1, out_pad), s.dtype).at[:, :s.shape[1]].set(s)
        return w_kio.astype(jnp.bfloat16), s.astype(jnp.float32)

    M = p["c5_w"].shape[0]
    M_pad = _round_up(M, LANE)

    args = []
    for name in ("c1", "c2", "c3", "c4"):
        args.extend(fold_conv(name))
    args.extend(fold_conv("c5", out_pad=M_pad))

    # fc6 + bn6, split into mean / std halves, rows padded to M_pad (zero rows
    # match the zero activations of the padded conv5 channels).
    scale6, shift6 = bn_scale_shift("bn6", p["fc6_b"])
    w6 = p["fc6_w"].T * scale6                                    # (2M, W)
    W_hid = w6.shape[1]
    w6m = jnp.zeros((M_pad, W_hid), jnp.float32).at[:M, :].set(w6[:M])
    w6s = jnp.zeros((M_pad, W_hid), jnp.float32).at[:M, :].set(w6[M:])
    args.append(w6m.astype(jnp.bfloat16))
    args.append(w6s.astype(jnp.bfloat16))
    args.append(shift6.reshape(1, -1).astype(jnp.float32))

    scale7, shift7 = bn_scale_shift("bn7", p["fc7_b"])
    args.append((p["fc7_w"].T * scale7).astype(jnp.bfloat16))
    args.append(shift7.reshape(1, -1).astype(jnp.float32))

    w8 = p["fc8_w"].T                                             # (W, L)
    b8 = p["fc8_b"]
    L = w8.shape[1]
    L_pad = _round_up(L, LANE)
    w8p = jnp.zeros((w8.shape[0], L_pad), jnp.float32).at[:, :L].set(w8)
    b8p = jnp.zeros((1, L_pad), jnp.float32).at[:, :L].set(b8[None, :])
    args.append(w8p.astype(jnp.bfloat16))
    args.append(b8p)
    return args


# ----------------------------------------------------------------------------
# Pure-JAX f32 reference (unfolded params, explicit inference-mode BN).
# ----------------------------------------------------------------------------
def ref_forward(x, p):
    h = x  # (B, T, C)
    for name, d in [("c1", 1), ("c2", 3), ("c3", 4), ("c4", 1), ("c5", 1)]:
        w, b = p[name + "_w"], p[name + "_b"]          # (out, in, K)
        K = w.shape[2]
        t_out = h.shape[1] - d * (K - 1)
        out = jnp.zeros((h.shape[0], t_out, w.shape[0]), jnp.float32) + b
        for k in range(K):
            out = out + jnp.einsum("btc,oc->bto", h[:, k * d:k * d + t_out, :], w[:, :, k])
        out = (out - p[name + "_m"]) / jnp.sqrt(p[name + "_v"] + BN_EPS) * p[name + "_g"] + p[name + "_beta"]
        h = jnp.maximum(out, 0.0)
    mean = h.mean(axis=1)
    std = jnp.sqrt(jnp.sum((h - mean[:, None, :]) ** 2, axis=1) / (h.shape[1] - 1))
    stat = jnp.concatenate([mean, std], axis=-1)

    def bn2(z, n):
        return (z - p[n + "_m"]) / jnp.sqrt(p[n + "_v"] + BN_EPS) * p[n + "_g"] + p[n + "_beta"]

    z = stat @ p["fc6_w"].T + p["fc6_b"]
    z = jnp.maximum(bn2(z, "bn6"), 0.0)
    z = z @ p["fc7_w"].T + p["fc7_b"]
    z = jnp.maximum(bn2(z, "bn7"), 0.0)
    return z @ p["fc8_w"].T + p["fc8_b"]


if __name__ == "__main__":
    # Small shapes consistent with the module: input_dim=24, base_width=32
    # (stands in for 512), stat-pool width M=64 (stands in for 1500),
    # n_labels=31, batch=2, T=32 frames.
    B, T, IN_DIM = 2, 32, 24
    W, M, L = 32, 64, 31

    key = jax.random.PRNGKey(0)
    k_params, k_x = jax.random.split(key)

    raw = make_raw_params(k_params, IN_DIM, W, M, L)
    args = fold_params(raw)

    # PyTorch forward input is (B, 1, T, input_dim); embed() squeezes dim 1 and
    # permutes to (B, C, T).  Our kernel consumes the (B, T, C) layout directly.
    x4 = jax.random.normal(k_x, (B, 1, T, IN_DIM), jnp.float32)
    x = jnp.squeeze(x4, axis=1)  # (B, T, IN_DIM)

    out = jax.block_until_ready(tdnn_xvector_forward(x, args, L))
    ref = ref_forward(x, raw)

    assert out.shape == (B, L), out.shape
    assert bool(jnp.all(jnp.isfinite(out)))
    # bf16 matmul operands -> compare relative to the output scale of the f32 ref.
    scale = float(jnp.max(jnp.abs(ref)))
    err = float(jnp.max(jnp.abs(out - ref)))
    assert err <= 0.08 * scale + 1e-6, (err, scale)
    print("KERNEL_OK")
</pallas_src>

<mosaic_0001>
module attributes {stable_mosaic.version = 11 : i64} {
  func.func @kernel(%arg0: i32, %arg1: memref<32x24xf32, #tpu.memory_space<vmem>>, %arg2: memref<5x24x32xbf16, #tpu.memory_space<vmem>>, %arg3: memref<1x32xf32, #tpu.memory_space<vmem>>, %arg4: memref<3x32x32xbf16, #tpu.memory_space<vmem>>, %arg5: memref<1x32xf32, #tpu.memory_space<vmem>>, %arg6: memref<3x32x32xbf16, #tpu.memory_space<vmem>>, %arg7: memref<1x32xf32, #tpu.memory_space<vmem>>, %arg8: memref<1x32x32xbf16, #tpu.memory_space<vmem>>, %arg9: memref<1x32xf32, #tpu.memory_space<vmem>>, %arg10: memref<1x32x128xbf16, #tpu.memory_space<vmem>>, %arg11: memref<1x128xf32, #tpu.memory_space<vmem>>, %arg12: memref<128x32xbf16, #tpu.memory_space<vmem>>, %arg13: memref<128x32xbf16, #tpu.memory_space<vmem>>, %arg14: memref<1x32xf32, #tpu.memory_space<vmem>>, %arg15: memref<32x32xbf16, #tpu.memory_space<vmem>>, %arg16: memref<1x32xf32, #tpu.memory_space<vmem>>, %arg17: memref<32x128xbf16, #tpu.memory_space<vmem>>, %arg18: memref<1x128xf32, #tpu.memory_space<vmem>>, %arg19: memref<1x1x128xf32, #tpu.memory_space<vmem>>) attributes {dimension_semantics = [#tpu.dimension_semantics<parallel>], iteration_bounds = array<i64: 2>, scalar_prefetch = 0 : i64, scratch_operands = 0 : i64, tpu.core_type = #tpu.core_type<tc>, window_params = [{transform_indices = @transform_0, window_bounds = array<i64: 32, 24>}, {pipeline_mode = #tpu.pipeline_mode<synchronous>, transform_indices = @transform_1, window_bounds = array<i64: 5, 24, 32>}, {pipeline_mode = #tpu.pipeline_mode<synchronous>, transform_indices = @transform_2, window_bounds = array<i64: 1, 32>}, {pipeline_mode = #tpu.pipeline_mode<synchronous>, transform_indices = @transform_3, window_bounds = array<i64: 3, 32, 32>}, {pipeline_mode = #tpu.pipeline_mode<synchronous>, transform_indices = @transform_4, window_bounds = array<i64: 1, 32>}, {pipeline_mode = #tpu.pipeline_mode<synchronous>, transform_indices = @transform_5, window_bounds = array<i64: 3, 32, 32>}, {pipeline_mode = #tpu.pipeline_mode<synchronous>, transform_indices = @transform_6, window_bounds = array<i64: 1, 32>}, {pipeline_mode = #tpu.pipeline_mode<synchronous>, transform_indices = @transform_7, window_bounds = array<i64: 1, 32, 32>}, {pipeline_mode = #tpu.pipeline_mode<synchronous>, transform_indices = @transform_8, window_bounds = array<i64: 1, 32>}, {pipeline_mode = #tpu.pipeline_mode<synchronous>, transform_indices = @transform_9, window_bounds = array<i64: 1, 32, 128>}, {pipeline_mode = #tpu.pipeline_mode<synchronous>, transform_indices = @transform_10, window_bounds = array<i64: 1, 128>}, {pipeline_mode = #tpu.pipeline_mode<synchronous>, transform_indices = @transform_11, window_bounds = array<i64: 128, 32>}, {pipeline_mode = #tpu.pipeline_mode<synchronous>, transform_indices = @transform_12, window_bounds = array<i64: 128, 32>}, {pipeline_mode = #tpu.pipeline_mode<synchronous>, transform_indices = @transform_13, window_bounds = array<i64: 1, 32>}, {pipeline_mode = #tpu.pipeline_mode<synchronous>, transform_indices = @transform_14, window_bounds = array<i64: 32, 32>}, {pipeline_mode = #tpu.pipeline_mode<synchronous>, transform_indices = @transform_15, window_bounds = array<i64: 1, 32>}, {pipeline_mode = #tpu.pipeline_mode<synchronous>, transform_indices = @transform_16, window_bounds = array<i64: 32, 128>}, {pipeline_mode = #tpu.pipeline_mode<synchronous>, transform_indices = @transform_17, window_bounds = array<i64: 1, 128>}, {transform_indices = @transform_18, window_bounds = array<i64: 1, 1, 128>}]} {
    %c0 = arith.constant 0 : index
    %c0_0 = arith.constant 0 : index
    %0 = vector.load %arg1[%c0, %c0_0] : memref<32x24xf32, #tpu.memory_space<vmem>>, vector<32x24xf32>
    %1 = arith.truncf %0 : vector<32x24xf32> to vector<32x24xbf16>
    %c0_1 = arith.constant 0 : index
    %c0_2 = arith.constant 0 : index
    %c0_3 = arith.constant 0 : index
    %2 = vector.load %arg2[%c0_1, %c0_2, %c0_3] : memref<5x24x32xbf16, #tpu.memory_space<vmem>>, vector<1x24x32xbf16>
    %3 = vector.shape_cast %2 : vector<1x24x32xbf16> to vector<24x32xbf16>
    %cst = arith.constant dense<0.000000e+00> : vector<32x32xf32>
    %4 = tpu.matmul %1, %3, %cst {dimension_numbers = #tpu.dot_dimension_numbers<[1], [0], [0], [1], [0, 0, 1, 1], [], []>} : vector<32x24xbf16>, vector<24x32xbf16>, vector<32x32xf32> -> vector<32x32xf32>
    %c31_i32 = arith.constant 31 : i32
    %5 = tpu.dynamic_rotate %0 by %c31_i32 dim 0 : vector<32x24xf32>, i32 -> vector<32x24xf32>
    %6 = arith.truncf %5 : vector<32x24xf32> to vector<32x24xbf16>
    %c1 = arith.constant 1 : index
    %c0_4 = arith.constant 0 : index
    %c0_5 = arith.constant 0 : index
    %7 = vector.load %arg2[%c1, %c0_4, %c0_5] : memref<5x24x32xbf16, #tpu.memory_space<vmem>>, vector<1x24x32xbf16>
    %8 = vector.shape_cast %7 : vector<1x24x32xbf16> to vector<24x32xbf16>
    %cst_6 = arith.constant dense<0.000000e+00> : vector<32x32xf32>
    %9 = tpu.matmul %6, %8, %cst_6 {dimension_numbers = #tpu.dot_dimension_numbers<[1], [0], [0], [1], [0, 0, 1, 1], [], []>} : vector<32x24xbf16>, vector<24x32xbf16>, vector<32x32xf32> -> vector<32x32xf32>
    %10 = arith.addf %4, %9 : vector<32x32xf32>
    %c30_i32 = arith.constant 30 : i32
    %11 = tpu.dynamic_rotate %0 by %c30_i32 dim 0 : vector<32x24xf32>, i32 -> vector<32x24xf32>
    %12 = arith.truncf %11 : vector<32x24xf32> to vector<32x24xbf16>
    %c2 = arith.constant 2 : index
    %c0_7 = arith.constant 0 : index
    %c0_8 = arith.constant 0 : index
    %13 = vector.load %arg2[%c2, %c0_7, %c0_8] : memref<5x24x32xbf16, #tpu.memory_space<vmem>>, vector<1x24x32xbf16>
    %14 = vector.shape_cast %13 : vector<1x24x32xbf16> to vector<24x32xbf16>
    %cst_9 = arith.constant dense<0.000000e+00> : vector<32x32xf32>
    %15 = tpu.matmul %12, %14, %cst_9 {dimension_numbers = #tpu.dot_dimension_numbers<[1], [0], [0], [1], [0, 0, 1, 1], [], []>} : vector<32x24xbf16>, vector<24x32xbf16>, vector<32x32xf32> -> vector<32x32xf32>
    %16 = arith.addf %10, %15 : vector<32x32xf32>
    %c29_i32 = arith.constant 29 : i32
    %17 = tpu.dynamic_rotate %0 by %c29_i32 dim 0 : vector<32x24xf32>, i32 -> vector<32x24xf32>
    %18 = arith.truncf %17 : vector<32x24xf32> to vector<32x24xbf16>
    %c3 = arith.constant 3 : index
    %c0_10 = arith.constant 0 : index
    %c0_11 = arith.constant 0 : index
    %19 = vector.load %arg2[%c3, %c0_10, %c0_11] : memref<5x24x32xbf16, #tpu.memory_space<vmem>>, vector<1x24x32xbf16>
    %20 = vector.shape_cast %19 : vector<1x24x32xbf16> to vector<24x32xbf16>
    %cst_12 = arith.constant dense<0.000000e+00> : vector<32x32xf32>
    %21 = tpu.matmul %18, %20, %cst_12 {dimension_numbers = #tpu.dot_dimension_numbers<[1], [0], [0], [1], [0, 0, 1, 1], [], []>} : vector<32x24xbf16>, vector<24x32xbf16>, vector<32x32xf32> -> vector<32x32xf32>
    %22 = arith.addf %16, %21 : vector<32x32xf32>
    %c28_i32 = arith.constant 28 : i32
    %23 = tpu.dynamic_rotate %0 by %c28_i32 dim 0 : vector<32x24xf32>, i32 -> vector<32x24xf32>
    %24 = arith.truncf %23 : vector<32x24xf32> to vector<32x24xbf16>
    %c4 = arith.constant 4 : index
    %c0_13 = arith.constant 0 : index
    %c0_14 = arith.constant 0 : index
    %25 = vector.load %arg2[%c4, %c0_13, %c0_14] : memref<5x24x32xbf16, #tpu.memory_space<vmem>>, vector<1x24x32xbf16>
    %26 = vector.shape_cast %25 : vector<1x24x32xbf16> to vector<24x32xbf16>
    %cst_15 = arith.constant dense<0.000000e+00> : vector<32x32xf32>
    %27 = tpu.matmul %24, %26, %cst_15 {dimension_numbers = #tpu.dot_dimension_numbers<[1], [0], [0], [1], [0, 0, 1, 1], [], []>} : vector<32x24xbf16>, vector<24x32xbf16>, vector<32x32xf32> -> vector<32x32xf32>
    %28 = arith.addf %22, %27 : vector<32x32xf32>
    %c0_16 = arith.constant 0 : index
    %c0_17 = arith.constant 0 : index
    %29 = vector.load %arg3[%c0_16, %c0_17] : memref<1x32xf32, #tpu.memory_space<vmem>>, vector<1x32xf32>
    %30 = vector.broadcast %29 : vector<1x32xf32> to vector<32x32xf32>
    %31 = arith.addf %28, %30 : vector<32x32xf32>
    %cst_18 = arith.constant 0.000000e+00 : f32
    %32 = vector.broadcast %cst_18 : f32 to vector<32x32xf32>
    %33 = arith.maximumf %31, %32 : vector<32x32xf32>
    %34 = arith.truncf %33 : vector<32x32xf32> to vector<32x32xbf16>
    %c0_19 = arith.constant 0 : index
    %c0_20 = arith.constant 0 : index
    %c0_21 = arith.constant 0 : index
    %35 = vector.load %arg4[%c0_19, %c0_20, %c0_21] : memref<3x32x32xbf16, #tpu.memory_space<vmem>>, vector<1x32x32xbf16>
    %36 = vector.shape_cast %35 : vector<1x32x32xbf16> to vector<32x32xbf16>
    %cst_22 = arith.constant dense<0.000000e+00> : vector<32x32xf32>
    %37 = tpu.matmul %34, %36, %cst_22 {dimension_numbers = #tpu.dot_dimension_numbers<[1], [0], [0], [1], [0, 0, 1, 1], [], []>} : vector<32x32xbf16>, vector<32x32xbf16>, vector<32x32xf32> -> vector<32x32xf32>
    %c29_i32_23 = arith.constant 29 : i32
    %38 = tpu.dynamic_rotate %33 by %c29_i32_23 dim 0 : vector<32x32xf32>, i32 -> vector<32x32xf32>
    %39 = arith.truncf %38 : vector<32x32xf32> to vector<32x32xbf16>
    %c1_24 = arith.constant 1 : index
    %c0_25 = arith.constant 0 : index
    %c0_26 = arith.constant 0 : index
    %40 = vector.load %arg4[%c1_24, %c0_25, %c0_26] : memref<3x32x32xbf16, #tpu.memory_space<vmem>>, vector<1x32x32xbf16>
    %41 = vector.shape_cast %40 : vector<1x32x32xbf16> to vector<32x32xbf16>
    %cst_27 = arith.constant dense<0.000000e+00> : vector<32x32xf32>
    %42 = tpu.matmul %39, %41, %cst_27 {dimension_numbers = #tpu.dot_dimension_numbers<[1], [0], [0], [1], [0, 0, 1, 1], [], []>} : vector<32x32xbf16>, vector<32x32xbf16>, vector<32x32xf32> -> vector<32x32xf32>
    %43 = arith.addf %37, %42 : vector<32x32xf32>
    %c26_i32 = arith.constant 26 : i32
    %44 = tpu.dynamic_rotate %33 by %c26_i32 dim 0 : vector<32x32xf32>, i32 -> vector<32x32xf32>
    %45 = arith.truncf %44 : vector<32x32xf32> to vector<32x32xbf16>
    %c2_28 = arith.constant 2 : index
    %c0_29 = arith.constant 0 : index
    %c0_30 = arith.constant 0 : index
    %46 = vector.load %arg4[%c2_28, %c0_29, %c0_30] : memref<3x32x32xbf16, #tpu.memory_space<vmem>>, vector<1x32x32xbf16>
    %47 = vector.shape_cast %46 : vector<1x32x32xbf16> to vector<32x32xbf16>
    %cst_31 = arith.constant dense<0.000000e+00> : vector<32x32xf32>
    %48 = tpu.matmul %45, %47, %cst_31 {dimension_numbers = #tpu.dot_dimension_numbers<[1], [0], [0], [1], [0, 0, 1, 1], [], []>} : vector<32x32xbf16>, vector<32x32xbf16>, vector<32x32xf32> -> vector<32x32xf32>
    %49 = arith.addf %43, %48 : vector<32x32xf32>
    %c0_32 = arith.constant 0 : index
    %c0_33 = arith.constant 0 : index
    %50 = vector.load %arg5[%c0_32, %c0_33] : memref<1x32xf32, #tpu.memory_space<vmem>>, vector<1x32xf32>
    %51 = vector.broadcast %50 : vector<1x32xf32> to vector<32x32xf32>
    %52 = arith.addf %49, %51 : vector<32x32xf32>
    %cst_34 = arith.constant 0.000000e+00 : f32
    %53 = vector.broadcast %cst_34 : f32 to vector<32x32xf32>
    %54 = arith.maximumf %52, %53 : vector<32x32xf32>
    %55 = arith.truncf %54 : vector<32x32xf32> to vector<32x32xbf16>
    %c0_35 = arith.constant 0 : index
    %c0_36 = arith.constant 0 : index
    %c0_37 = arith.constant 0 : index
    %56 = vector.load %arg6[%c0_35, %c0_36, %c0_37] : memref<3x32x32xbf16, #tpu.memory_space<vmem>>, vector<1x32x32xbf16>
    %57 = vector.shape_cast %56 : vector<1x32x32xbf16> to vector<32x32xbf16>
    %cst_38 = arith.constant dense<0.000000e+00> : vector<32x32xf32>
    %58 = tpu.matmul %55, %57, %cst_38 {dimension_numbers = #tpu.dot_dimension_numbers<[1], [0], [0], [1], [0, 0, 1, 1], [], []>} : vector<32x32xbf16>, vector<32x32xbf16>, vector<32x32xf32> -> vector<32x32xf32>
    %c28_i32_39 = arith.constant 28 : i32
    %59 = tpu.dynamic_rotate %54 by %c28_i32_39 dim 0 : vector<32x32xf32>, i32 -> vector<32x32xf32>
    %60 = arith.truncf %59 : vector<32x32xf32> to vector<32x32xbf16>
    %c1_40 = arith.constant 1 : index
    %c0_41 = arith.constant 0 : index
    %c0_42 = arith.constant 0 : index
    %61 = vector.load %arg6[%c1_40, %c0_41, %c0_42] : memref<3x32x32xbf16, #tpu.memory_space<vmem>>, vector<1x32x32xbf16>
    %62 = vector.shape_cast %61 : vector<1x32x32xbf16> to vector<32x32xbf16>
    %cst_43 = arith.constant dense<0.000000e+00> : vector<32x32xf32>
    %63 = tpu.matmul %60, %62, %cst_43 {dimension_numbers = #tpu.dot_dimension_numbers<[1], [0], [0], [1], [0, 0, 1, 1], [], []>} : vector<32x32xbf16>, vector<32x32xbf16>, vector<32x32xf32> -> vector<32x32xf32>
    %64 = arith.addf %58, %63 : vector<32x32xf32>
    %c24_i32 = arith.constant 24 : i32
    %65 = tpu.dynamic_rotate %54 by %c24_i32 dim 0 : vector<32x32xf32>, i32 -> vector<32x32xf32>
    %66 = arith.truncf %65 : vector<32x32xf32> to vector<32x32xbf16>
    %c2_44 = arith.constant 2 : index
    %c0_45 = arith.constant 0 : index
    %c0_46 = arith.constant 0 : index
    %67 = vector.load %arg6[%c2_44, %c0_45, %c0_46] : memref<3x32x32xbf16, #tpu.memory_space<vmem>>, vector<1x32x32xbf16>
    %68 = vector.shape_cast %67 : vector<1x32x32xbf16> to vector<32x32xbf16>
    %cst_47 = arith.constant dense<0.000000e+00> : vector<32x32xf32>
    %69 = tpu.matmul %66, %68, %cst_47 {dimension_numbers = #tpu.dot_dimension_numbers<[1], [0], [0], [1], [0, 0, 1, 1], [], []>} : vector<32x32xbf16>, vector<32x32xbf16>, vector<32x32xf32> -> vector<32x32xf32>
    %70 = arith.addf %64, %69 : vector<32x32xf32>
    %c0_48 = arith.constant 0 : index
    %c0_49 = arith.constant 0 : index
    %71 = vector.load %arg7[%c0_48, %c0_49] : memref<1x32xf32, #tpu.memory_space<vmem>>, vector<1x32xf32>
    %72 = vector.broadcast %71 : vector<1x32xf32> to vector<32x32xf32>
    %73 = arith.addf %70, %72 : vector<32x32xf32>
    %cst_50 = arith.constant 0.000000e+00 : f32
    %74 = vector.broadcast %cst_50 : f32 to vector<32x32xf32>
    %75 = arith.maximumf %73, %74 : vector<32x32xf32>
    %76 = arith.truncf %75 : vector<32x32xf32> to vector<32x32xbf16>
    %c0_51 = arith.constant 0 : index
    %c0_52 = arith.constant 0 : index
    %c0_53 = arith.constant 0 : index
    %77 = vector.load %arg8[%c0_51, %c0_52, %c0_53] : memref<1x32x32xbf16, #tpu.memory_space<vmem>>, vector<1x32x32xbf16>
    %78 = vector.shape_cast %77 : vector<1x32x32xbf16> to vector<32x32xbf16>
    %cst_54 = arith.constant dense<0.000000e+00> : vector<32x32xf32>
    %79 = tpu.matmul %76, %78, %cst_54 {dimension_numbers = #tpu.dot_dimension_numbers<[1], [0], [0], [1], [0, 0, 1, 1], [], []>} : vector<32x32xbf16>, vector<32x32xbf16>, vector<32x32xf32> -> vector<32x32xf32>
    %c0_55 = arith.constant 0 : index
    %c0_56 = arith.constant 0 : index
    %80 = vector.load %arg9[%c0_55, %c0_56] : memref<1x32xf32, #tpu.memory_space<vmem>>, vector<1x32xf32>
    %81 = vector.broadcast %80 : vector<1x32xf32> to vector<32x32xf32>
    %82 = arith.addf %79, %81 : vector<32x32xf32>
    %cst_57 = arith.constant 0.000000e+00 : f32
    %83 = vector.broadcast %cst_57 : f32 to vector<32x32xf32>
    %84 = arith.maximumf %82, %83 : vector<32x32xf32>
    %85 = arith.truncf %84 : vector<32x32xf32> to vector<32x32xbf16>
    %c0_58 = arith.constant 0 : index
    %c0_59 = arith.constant 0 : index
    %c0_60 = arith.constant 0 : index
    %86 = vector.load %arg10[%c0_58, %c0_59, %c0_60] : memref<1x32x128xbf16, #tpu.memory_space<vmem>>, vector<1x32x128xbf16>
    %87 = vector.shape_cast %86 : vector<1x32x128xbf16> to vector<32x128xbf16>
    %cst_61 = arith.constant dense<0.000000e+00> : vector<32x128xf32>
    %88 = tpu.matmul %85, %87, %cst_61 {dimension_numbers = #tpu.dot_dimension_numbers<[1], [0], [0], [1], [0, 0, 1, 1], [], []>} : vector<32x32xbf16>, vector<32x128xbf16>, vector<32x128xf32> -> vector<32x128xf32>
    %c0_62 = arith.constant 0 : index
    %c0_63 = arith.constant 0 : index
    %89 = vector.load %arg11[%c0_62, %c0_63] : memref<1x128xf32, #tpu.memory_space<vmem>>, vector<1x128xf32>
    %90 = vector.broadcast %89 : vector<1x128xf32> to vector<32x128xf32>
    %91 = arith.addf %88, %90 : vector<32x128xf32>
    %cst_64 = arith.constant 0.000000e+00 : f32
    %92 = vector.broadcast %cst_64 : f32 to vector<32x128xf32>
    %93 = arith.maximumf %91, %92 : vector<32x128xf32>
    %94 = vector.shape_cast %93 : vector<32x128xf32> to vector<1x32x128xf32>
    %95 = tpu.iota {dimensions = array<i32: 0>} : vector<32x1xi32>
    %96 = vector.shape_cast %95 : vector<32x1xi32> to vector<1x32x1xi32>
    %c14_i32 = arith.constant 14 : i32
    %97 = vector.broadcast %c14_i32 : i32 to vector<1x32x1xi32>
    %98 = arith.cmpi slt, %96, %97 : vector<1x32x1xi32>
    %99 = arith.extui %98 : vector<1x32x1xi1> to vector<1x32x1xi32>
    %100 = arith.sitofp %99 : vector<1x32x1xi32> to vector<1x32x1xf32>
    %101 = vector.broadcast %100 : vector<1x32x1xf32> to vector<1x32x128xf32>
    %102 = arith.mulf %94, %101 : vector<1x32x128xf32>
    %cst_65 = arith.constant dense<0.000000e+00> : vector<1x128xf32>
    %103 = vector.multi_reduction <add>, %102, %cst_65 [1] : vector<1x32x128xf32> to vector<1x128xf32>
    %cst_66 = arith.constant 0.0714285746 : f32
    %104 = vector.broadcast %cst_66 : f32 to vector<1x128xf32>
    %105 = arith.mulf %103, %104 : vector<1x128xf32>
    %106 = vector.shape_cast %105 : vector<1x128xf32> to vector<1x1x128xf32>
    %107 = vector.broadcast %106 : vector<1x1x128xf32> to vector<1x32x128xf32>
    %108 = arith.subf %94, %107 : vector<1x32x128xf32>
    %109 = vector.broadcast %100 : vector<1x32x1xf32> to vector<1x32x128xf32>
    %110 = arith.mulf %108, %109 : vector<1x32x128xf32>
    %111 = arith.mulf %110, %110 : vector<1x32x128xf32>
    %cst_67 = arith.constant dense<0.000000e+00> : vector<1x128xf32>
    %112 = vector.multi_reduction <add>, %111, %cst_67 [1] : vector<1x32x128xf32> to vector<1x128xf32>
    %cst_68 = arith.constant 0.0769230798 : f32
    %113 = vector.broadcast %cst_68 : f32 to vector<1x128xf32>
    %114 = arith.mulf %112, %113 : vector<1x128xf32>
    %cst_69 = arith.constant 0.000000e+00 : f32
    %115 = vector.broadcast %cst_69 : f32 to vector<1x128xf32>
    %116 = arith.maximumf %114, %115 : vector<1x128xf32>
    %117 = math.sqrt %116 : vector<1x128xf32>
    %118 = arith.truncf %105 : vector<1x128xf32> to vector<1x128xbf16>
    %c0_70 = arith.constant 0 : index
    %c0_71 = arith.constant 0 : index
    %119 = vector.load %arg12[%c0_70, %c0_71] : memref<128x32xbf16, #tpu.memory_space<vmem>>, vector<128x32xbf16>
    %cst_72 = arith.constant dense<0.000000e+00> : vector<1x32xf32>
    %120 = tpu.matmul %118, %119, %cst_72 {dimension_numbers = #tpu.dot_dimension_numbers<[1], [0], [0], [1], [0, 0, 1, 1], [], []>} : vector<1x128xbf16>, vector<128x32xbf16>, vector<1x32xf32> -> vector<1x32xf32>
    %121 = arith.truncf %117 : vector<1x128xf32> to vector<1x128xbf16>
    %c0_73 = arith.constant 0 : index
    %c0_74 = arith.constant 0 : index
    %122 = vector.load %arg13[%c0_73, %c0_74] : memref<128x32xbf16, #tpu.memory_space<vmem>>, vector<128x32xbf16>
    %cst_75 = arith.constant dense<0.000000e+00> : vector<1x32xf32>
    %123 = tpu.matmul %121, %122, %cst_75 {dimension_numbers = #tpu.dot_dimension_numbers<[1], [0], [0], [1], [0, 0, 1, 1], [], []>} : vector<1x128xbf16>, vector<128x32xbf16>, vector<1x32xf32> -> vector<1x32xf32>
    %124 = arith.addf %120, %123 : vector<1x32xf32>
    %c0_76 = arith.constant 0 : index
    %c0_77 = arith.constant 0 : index
    %125 = vector.load %arg14[%c0_76, %c0_77] : memref<1x32xf32, #tpu.memory_space<vmem>>, vector<1x32xf32>
    %126 = arith.addf %124, %125 : vector<1x32xf32>
    %cst_78 = arith.constant 0.000000e+00 : f32
    %127 = vector.broadcast %cst_78 : f32 to vector<1x32xf32>
    %128 = arith.maximumf %126, %127 : vector<1x32xf32>
    %129 = arith.truncf %128 : vector<1x32xf32> to vector<1x32xbf16>
    %c0_79 = arith.constant 0 : index
    %c0_80 = arith.constant 0 : index
    %130 = vector.load %arg15[%c0_79, %c0_80] : memref<32x32xbf16, #tpu.memory_space<vmem>>, vector<32x32xbf16>
    %cst_81 = arith.constant dense<0.000000e+00> : vector<1x32xf32>
    %131 = tpu.matmul %129, %130, %cst_81 {dimension_numbers = #tpu.dot_dimension_numbers<[1], [0], [0], [1], [0, 0, 1, 1], [], []>} : vector<1x32xbf16>, vector<32x32xbf16>, vector<1x32xf32> -> vector<1x32xf32>
    %c0_82 = arith.constant 0 : index
    %c0_83 = arith.constant 0 : index
    %132 = vector.load %arg16[%c0_82, %c0_83] : memref<1x32xf32, #tpu.memory_space<vmem>>, vector<1x32xf32>
    %133 = arith.addf %131, %132 : vector<1x32xf32>
    %cst_84 = arith.constant 0.000000e+00 : f32
    %134 = vector.broadcast %cst_84 : f32 to vector<1x32xf32>
    %135 = arith.maximumf %133, %134 : vector<1x32xf32>
    %136 = arith.truncf %135 : vector<1x32xf32> to vector<1x32xbf16>
    %c0_85 = arith.constant 0 : index
    %c0_86 = arith.constant 0 : index
    %137 = vector.load %arg17[%c0_85, %c0_86] : memref<32x128xbf16, #tpu.memory_space<vmem>>, vector<32x128xbf16>
    %cst_87 = arith.constant dense<0.000000e+00> : vector<1x128xf32>
    %138 = tpu.matmul %136, %137, %cst_87 {dimension_numbers = #tpu.dot_dimension_numbers<[1], [0], [0], [1], [0, 0, 1, 1], [], []>} : vector<1x32xbf16>, vector<32x128xbf16>, vector<1x128xf32> -> vector<1x128xf32>
    %c0_88 = arith.constant 0 : index
    %c0_89 = arith.constant 0 : index
    %139 = vector.load %arg18[%c0_88, %c0_89] : memref<1x128xf32, #tpu.memory_space<vmem>>, vector<1x128xf32>
    %140 = arith.addf %138, %139 : vector<1x128xf32>
    %141 = vector.shape_cast %140 : vector<1x128xf32> to vector<1x1x128xf32>
    %c0_90 = arith.constant 0 : index
    %c0_91 = arith.constant 0 : index
    %c0_92 = arith.constant 0 : index
    %142 = vector.load %arg19[%c0_90, %c0_91, %c0_92] : memref<1x1x128xf32, #tpu.memory_space<vmem>>, vector<1x1x128xf32>
    tpu.vector_store %arg19[%c0_90, %c0_91, %c0_92], %141 {strides = array<i32>} : memref<1x1x128xf32, #tpu.memory_space<vmem>>, vector<1x1x128xf32>,
    return
  }
  func.func @transform_0(%arg0: i32) -> (i32, i32) {
    %c0_i32 = arith.constant 0 : i32
    %c0_i32_0 = arith.constant 0 : i32
    return %arg0, %c0_i32 : i32, i32
  }
  func.func @transform_1(%arg0: i32) -> (i32, i32, i32) {
    %c0_i32 = arith.constant 0 : i32
    %c0_i32_0 = arith.constant 0 : i32
    %c0_i32_1 = arith.constant 0 : i32
    %c0_i32_2 = arith.constant 0 : i32
    return %c0_i32, %c0_i32_0, %c0_i32_1 : i32, i32, i32
  }
  func.func @transform_2(%arg0: i32) -> (i32, i32) {
    %c0_i32 = arith.constant 0 : i32
    %c0_i32_0 = arith.constant 0 : i32
    %c0_i32_1 = arith.constant 0 : i32
    return %c0_i32, %c0_i32_0 : i32, i32
  }
  func.func @transform_3(%arg0: i32) -> (i32, i32, i32) {
    %c0_i32 = arith.constant 0 : i32
    %c0_i32_0 = arith.constant 0 : i32
    %c0_i32_1 = arith.constant 0 : i32
    %c0_i32_2 = arith.constant 0 : i32
    return %c0_i32, %c0_i32_0, %c0_i32_1 : i32, i32, i32
  }
  func.func @transform_4(%arg0: i32) -> (i32, i32) {
    %c0_i32 = arith.constant 0 : i32
    %c0_i32_0 = arith.constant 0 : i32
    %c0_i32_1 = arith.constant 0 : i32
    return %c0_i32, %c0_i32_0 : i32, i32
  }
  func.func @transform_5(%arg0: i32) -> (i32, i32, i32) {
    %c0_i32 = arith.constant 0 : i32
    %c0_i32_0 = arith.constant 0 : i32
    %c0_i32_1 = arith.constant 0 : i32
    %c0_i32_2 = arith.constant 0 : i32
    return %c0_i32, %c0_i32_0, %c0_i32_1 : i32, i32, i32
  }
  func.func @transform_6(%arg0: i32) -> (i32, i32) {
    %c0_i32 = arith.constant 0 : i32
    %c0_i32_0 = arith.constant 0 : i32
    %c0_i32_1 = arith.constant 0 : i32
    return %c0_i32, %c0_i32_0 : i32, i32
  }
  func.func @transform_7(%arg0: i32) -> (i32, i32, i32) {
    %c0_i32 = arith.constant 0 : i32
    %c0_i32_0 = arith.constant 0 : i32
    %c0_i32_1 = arith.constant 0 : i32
    %c0_i32_2 = arith.constant 0 : i32
    return %c0_i32, %c0_i32_0, %c0_i32_1 : i32, i32, i32
  }
  func.func @transform_8(%arg0: i32) -> (i32, i32) {
    %c0_i32 = arith.constant 0 : i32
    %c0_i32_0 = arith.constant 0 : i32
    %c0_i32_1 = arith.constant 0 : i32
    return %c0_i32, %c0_i32_0 : i32, i32
  }
  func.func @transform_9(%arg0: i32) -> (i32, i32, i32) {
    %c0_i32 = arith.constant 0 : i32
    %c0_i32_0 = arith.constant 0 : i32
    %c0_i32_1 = arith.constant 0 : i32
    %c0_i32_2 = arith.constant 0 : i32
    return %c0_i32, %c0_i32_0, %c0_i32_1 : i32, i32, i32
  }
  func.func @transform_10(%arg0: i32) -> (i32, i32) {
    %c0_i32 = arith.constant 0 : i32
    %c0_i32_0 = arith.constant 0 : i32
    %c0_i32_1 = arith.constant 0 : i32
    return %c0_i32, %c0_i32_0 : i32, i32
  }
  func.func @transform_11(%arg0: i32) -> (i32, i32) {
    %c0_i32 = arith.constant 0 : i32
    %c0_i32_0 = arith.constant 0 : i32
    %c0_i32_1 = arith.constant 0 : i32
    return %c0_i32, %c0_i32_0 : i32, i32
  }
  func.func @transform_12(%arg0: i32) -> (i32, i32) {
    %c0_i32 = arith.constant 0 : i32
    %c0_i32_0 = arith.constant 0 : i32
    %c0_i32_1 = arith.constant 0 : i32
    return %c0_i32, %c0_i32_0 : i32, i32
  }
  func.func @transform_13(%arg0: i32) -> (i32, i32) {
    %c0_i32 = arith.constant 0 : i32
    %c0_i32_0 = arith.constant 0 : i32
    %c0_i32_1 = arith.constant 0 : i32
    return %c0_i32, %c0_i32_0 : i32, i32
  }
  func.func @transform_14(%arg0: i32) -> (i32, i32) {
    %c0_i32 = arith.constant 0 : i32
    %c0_i32_0 = arith.constant 0 : i32
    %c0_i32_1 = arith.constant 0 : i32
    return %c0_i32, %c0_i32_0 : i32, i32
  }
  func.func @transform_15(%arg0: i32) -> (i32, i32) {
    %c0_i32 = arith.constant 0 : i32
    %c0_i32_0 = arith.constant 0 : i32
    %c0_i32_1 = arith.constant 0 : i32
    return %c0_i32, %c0_i32_0 : i32, i32
  }
  func.func @transform_16(%arg0: i32) -> (i32, i32) {
    %c0_i32 = arith.constant 0 : i32
    %c0_i32_0 = arith.constant 0 : i32
    %c0_i32_1 = arith.constant 0 : i32
    return %c0_i32, %c0_i32_0 : i32, i32
  }
  func.func @transform_17(%arg0: i32) -> (i32, i32) {
    %c0_i32 = arith.constant 0 : i32
    %c0_i32_0 = arith.constant 0 : i32
    %c0_i32_1 = arith.constant 0 : i32
    return %c0_i32, %c0_i32_0 : i32, i32
  }
  func.func @transform_18(%arg0: i32) -> (i32, i32, i32) {
    %c0_i32 = arith.constant 0 : i32
    %c0_i32_0 = arith.constant 0 : i32
    %c0_i32_1 = arith.constant 0 : i32
    return %arg0, %c0_i32, %c0_i32_0 : i32, i32, i32
  }
}

</mosaic_0001>

<llo_original>
// kernel: tpu_custom_call.1
$region0: #{tpu_custom_call.1}
  #allocation0 [shape = 'u32[]', space=smem, size = 0x4, offset = 0x4, fixed_abs, tag = 'smem constant byte address 0x4 - core index']
  #allocation1 [shape = 'u32[72,128]{1,0:T(1,128)}', space=vmem, size = 0x9000, scoped, tag = 'internal scratch']
  %s0 = inlined_call_operand.vmem [shape: f32[64,24], index: 0, kind: input, shape index: {}]
  %s1 = inlined_call_operand.vmem [shape: bf16[5,24,32], index: 1, kind: input, shape index: {}]
  %s2 = inlined_call_operand.vmem [shape: f32[1,32], index: 2, kind: input, shape index: {}]
  %s3 = inlined_call_operand.vmem [shape: bf16[3,32,32], index: 3, kind: input, shape index: {}]
  %s4 = inlined_call_operand.hbm [shape: f32[1,32], index: 4, kind: input, shape index: {}]
  %s5 = inlined_call_operand.vmem [shape: bf16[3,32,32], index: 5, kind: input, shape index: {}]
  %s6 = inlined_call_operand.hbm [shape: f32[1,32], index: 6, kind: input, shape index: {}]
  %s7 = inlined_call_operand.vmem [shape: bf16[1,32,32], index: 7, kind: input, shape index: {}]
  %s8 = inlined_call_operand.hbm [shape: f32[1,32], index: 8, kind: input, shape index: {}]
  %s9 = inlined_call_operand.vmem [shape: bf16[1,32,128], index: 9, kind: input, shape index: {}]
  %s10 = inlined_call_operand.vmem [shape: f32[1,128], index: 10, kind: input, shape index: {}]
  %s11 = inlined_call_operand.vmem [shape: bf16[128,32], index: 11, kind: input, shape index: {}]
  %s12 = inlined_call_operand.vmem [shape: bf16[128,32], index: 12, kind: input, shape index: {}]
  %s13 = inlined_call_operand.vmem [shape: f32[1,32], index: 13, kind: input, shape index: {}]
  %s14 = inlined_call_operand.vmem [shape: bf16[32,32], index: 14, kind: input, shape index: {}]
  %s15 = inlined_call_operand.vmem [shape: f32[1,32], index: 15, kind: input, shape index: {}]
  %s16 = inlined_call_operand.vmem [shape: bf16[32,128], index: 16, kind: input, shape index: {}]
  %s17 = inlined_call_operand.vmem [shape: f32[1,128], index: 17, kind: input, shape index: {}]
  %s18 = inlined_call_operand.hbm [shape: f32[2,1,128], index: 18, kind: output, shape index: {}]
  %s19 = sld [smem:[#allocation0]]
  $region117: #{tpu_custom_call.1} parent=0
    _
  %s21 = ssub.s32 1, %s19
  %s22 = scalar_select 0, %s21, %s19
  $region1: #{tpu_custom_call.1} parent=0
    #allocation2 [shape = 'u8[512]{0}', space=vmem, size = 0x400, scoped, tag = 'input window, operand 4, single buffered']
    #allocation3 [shape = 's32[2]{0}', space=sflag, size = 0x8, scoped, tag = 'scoped memory for tpu_custom_call.1']
    #allocation4 [shape = 's32[2]{0}', space=sflag, size = 0x8, scoped, tag = 'scoped memory for tpu_custom_call.1']
    #allocation5 [shape = 'u8[512]{0}', space=vmem, size = 0x400, scoped, tag = 'input window, operand 6, single buffered']
    #allocation6 [shape = 's32[1]{0}', space=sflag, size = 0x4, scoped, tag = 'scoped memory for tpu_custom_call.1']
    #allocation7 [shape = 'u8[512]{0}', space=vmem, size = 0x400, scoped, tag = 'input window, operand 8, single buffered']
    #allocation8 [shape = 'u8[1024]{0}', space=vmem, size = 0x400, scoped, tag = 'output window, operand 0']
    %23 = vsyncpa [#allocation3], 0
    %24 = vsyncpa [#allocation6], 0
    %25 = vsyncpa [#allocation4], 0
    %s26 = scalar_lea.sflag [#allocation4], 1
    %27 = vsyncpa %s26, 0
    loop: start=0, step=1, limit=4
    $region2: #{tpu_custom_call.1} parent=1 // loop_pre_header
      _
    $region3: #{tpu_custom_call.1} parent=1 // loop_header
      %s29 = sphi 0, %s33
      %p30 = scmp.ge.s32.totalorder %s29, 4
      %s39 = sphi 0, %s41
      %s42 = sphi 0, %s39
      %s43 = sphi 0, %s42
      %s59 = sphi 0, %s43
      %s63 = sphi 0, %s63
      %s65 = sphi 0, %s63
      %s66 = sphi 0, %s65
      %s80 = sphi 0, %s66
      %s84 = sphi 0, %s84
      %s86 = sphi 0, %s84
      %s87 = sphi 0, %s86
      %s101 = sphi 0, %s87
      %s105 = sphi 0, %s105
      %s107 = sphi 0, %s105
      %s108 = sphi 0, %s107
      %s122 = sphi 0, %s108
      %s126 = sphi 0, %s126
      %s128 = sphi 0, %s126
      %s129 = sphi 0, %s128
      %s143 = sphi 0, %s129
      %s147 = sphi 0, %s147
      %s149 = sphi 0, %s147
      %s150 = sphi 0, %s149
      %s164 = sphi 0, %s150
      %s168 = sphi 0, %s168
      %s170 = sphi 0, %s168
      %s171 = sphi 0, %s170
      %s185 = sphi 0, %s171
      %s189 = sphi 0, %s189
      %s191 = sphi 0, %s189
      %s192 = sphi 0, %s191
      %s206 = sphi 0, %s192
      %s210 = sphi 0, %s210
      %s212 = sphi 0, %s210
      %s213 = sphi 0, %s212
      %s227 = sphi 0, %s213
      %s231 = sphi 0, %s231
      %s233 = sphi 0, %s231
      %s234 = sphi 0, %s233
      %s248 = sphi 0, %s234
      %s252 = sphi 0, %s252
      %s254 = sphi 0, %s252
      %s255 = sphi 0, %s254
      %s269 = sphi 0, %s255
      %s273 = sphi 0, %s273
      %s275 = sphi 0, %s273
      %s276 = sphi 0, %s275
      %s290 = sphi 0, %s276
      %s294 = sphi 0, %s294
      %s296 = sphi 0, %s294
      %s297 = sphi 0, %s296
      %s311 = sphi 0, %s297
      %s315 = sphi 0, %s315
      %s317 = sphi 0, %s315
      %s318 = sphi 0, %s317
      %s332 = sphi 0, %s318
      %s336 = sphi 0, %s336
      %s338 = sphi 0, %s336
      %s339 = sphi 0, %s338
      %s353 = sphi 0, %s339
      %s357 = sphi 0, %s357
      %s359 = sphi 0, %s357
      %s360 = sphi 0, %s359
      %s374 = sphi 0, %s360
      %s378 = sphi 0, %s378
      %s380 = sphi 0, %s378
      %s381 = sphi 0, %s380
      %s395 = sphi 0, %s381
      %s399 = sphi 0, %s399
      %s401 = sphi 0, %s399
      %s402 = sphi 0, %s401
      %s416 = sphi 0, %s402
      %s422 = sphi 0, %s424
      %s425 = sphi 0, %s422
      %s426 = sphi 0, %s425
      %s442 = sphi 0, %s426
    $region4: #{tpu_custom_call.1} parent=1 // loop_header_branch
      %32 = sbr.rel (%p30) target = $region8
    $region5: #{tpu_custom_call.1} parent=1 // loop_body
      %s34 = ssub.s32 %s29, 1
      %s35 = ssub.s32 %s29, 2
      %s36 = sadd.s32 %s29, 1
      %s37 = ssub.s32 %s29, %s36
      %p38 = scmp.eq.s32.totalorder %s37, 0
      %s40 = sadd.s32 %s39, 1
      %s41 = scalar_select %p38, %s39, %s40
      %p44 = pneg %p38
      %p45 = scmp.eq.s32.totalorder %s29, 1
      %p46 = por %p44, %p45
      %p47 = scmp.ne.s32.totalorder %s39, %s42
      %p48 = scmp.eq.s32.totalorder %s29, 0
      %p49 = por %p47, %p48
      %p50 = scmp.ne.s32.totalorder %s39, %s42
      %p51 = scmp.eq.s32.totalorder %s34, 1
      %p52 = por %p50, %p51
      %p53 = scmp.ne.s32.totalorder %s42, %s43
      %p54 = scmp.eq.s32.totalorder %s34, 0
      %p55 = por %p53, %p54
      %p56 = scmp.ne.s32.totalorder %s42, %s43
      %p57 = scmp.eq.s32.totalorder %s35, 1
      %p58 = por %p56, %p57
      %p60 = scmp.ne.s32.totalorder %s43, %s59
      %p61 = scmp.eq.s32.totalorder %s35, 0
      %p62 = por %p60, %p61
      %s64 = sadd.s32 %s63, 1
      %p67 = scmp.eq.s32.totalorder %s29, 1
      %p68 = scmp.ne.s32.totalorder %s63, %s65
      %p69 = scmp.eq.s32.totalorder %s29, 0
      %p70 = por %p68, %p69
      %p71 = scmp.ne.s32.totalorder %s63, %s65
      %p72 = scmp.eq.s32.totalorder %s34, 1
      %p73 = por %p71, %p72
      %p74 = scmp.ne.s32.totalorder %s65, %s66
      %p75 = scmp.eq.s32.totalorder %s34, 0
      %p76 = por %p74, %p75
      %p77 = scmp.ne.s32.totalorder %s65, %s66
      %p78 = scmp.eq.s32.totalorder %s35, 1
      %p79 = por %p77, %p78
      %p81 = scmp.ne.s32.totalorder %s66, %s80
      %p82 = scmp.eq.s32.totalorder %s35, 0
      %p83 = por %p81, %p82
      %s85 = sadd.s32 %s84, 1
      %p88 = scmp.eq.s32.totalorder %s29, 1
      %p89 = scmp.ne.s32.totalorder %s84, %s86
      %p90 = scmp.eq.s32.totalorder %s29, 0
      %p91 = por %p89, %p90
      %p92 = scmp.ne.s32.totalorder %s84, %s86
      %p93 = scmp.eq.s32.totalorder %s34, 1
      %p94 = por %p92, %p93
      %p95 = scmp.ne.s32.totalorder %s86, %s87
      %p96 = scmp.eq.s32.totalorder %s34, 0
      %p97 = por %p95, %p96
      %p98 = scmp.ne.s32.totalorder %s86, %s87
      %p99 = scmp.eq.s32.totalorder %s35, 1
      %p100 = por %p98, %p99
      %p102 = scmp.ne.s32.totalorder %s87, %s101
      %p103 = scmp.eq.s32.totalorder %s35, 0
      %p104 = por %p102, %p103
      %s106 = sadd.s32 %s105, 1
      %p109 = scmp.eq.s32.totalorder %s29, 1
      %p110 = scmp.ne.s32.totalorder %s105, %s107
      %p111 = scmp.eq.s32.totalorder %s29, 0
      %p112 = por %p110, %p111
      %p113 = scmp.ne.s32.totalorder %s105, %s107
      %p114 = scmp.eq.s32.totalorder %s34, 1
      %p115 = por %p113, %p114
      %p116 = scmp.ne.s32.totalorder %s107, %s108
      %p117 = scmp.eq.s32.totalorder %s34, 0
      %p118 = por %p116, %p117
      %p119 = scmp.ne.s32.totalorder %s107, %s108
      %p120 = scmp.eq.s32.totalorder %s35, 1
      %p121 = por %p119, %p120
      %p123 = scmp.ne.s32.totalorder %s108, %s122
      %p124 = scmp.eq.s32.totalorder %s35, 0
      %p125 = por %p123, %p124
      %s127 = sadd.s32 %s126, 1
      %p130 = scmp.eq.s32.totalorder %s29, 1
      %p131 = scmp.ne.s32.totalorder %s126, %s128
      %p132 = scmp.eq.s32.totalorder %s29, 0
      %p133 = por %p131, %p132
      %p134 = scmp.ne.s32.totalorder %s126, %s128
      %p135 = scmp.eq.s32.totalorder %s34, 1
      %p136 = por %p134, %p135
      %p137 = scmp.ne.s32.totalorder %s128, %s129
      %p138 = scmp.eq.s32.totalorder %s34, 0
      %p139 = por %p137, %p138
      %p140 = scmp.ne.s32.totalorder %s128, %s129
      %p141 = scmp.eq.s32.totalorder %s35, 1
      %p142 = por %p140, %p141
      %p144 = scmp.ne.s32.totalorder %s129, %s143
      %p145 = scmp.eq.s32.totalorder %s35, 0
      %p146 = por %p144, %p145
      %s148 = sadd.s32 %s147, 1
      %p151 = scmp.eq.s32.totalorder %s29, 1
      %p152 = scmp.ne.s32.totalorder %s147, %s149
      %p153 = scmp.eq.s32.totalorder %s29, 0
      %p154 = por %p152, %p153
      %p155 = scmp.ne.s32.totalorder %s147, %s149
      %p156 = scmp.eq.s32.totalorder %s34, 1
      %p157 = por %p155, %p156
      %p158 = scmp.ne.s32.totalorder %s149, %s150
      %p159 = scmp.eq.s32.totalorder %s34, 0
      %p160 = por %p158, %p159
      %p161 = scmp.ne.s32.totalorder %s149, %s150
      %p162 = scmp.eq.s32.totalorder %s35, 1
      %p163 = por %p161, %p162
      %p165 = scmp.ne.s32.totalorder %s150, %s164
      %p166 = scmp.eq.s32.totalorder %s35, 0
      %p167 = por %p165, %p166
      %s169 = sadd.s32 %s168, 1
      %p172 = scmp.eq.s32.totalorder %s29, 1
      %p173 = scmp.ne.s32.totalorder %s168, %s170
      %p174 = scmp.eq.s32.totalorder %s29, 0
      %p175 = por %p173, %p174
      %p176 = scmp.ne.s32.totalorder %s168, %s170
      %p177 = scmp.eq.s32.totalorder %s34, 1
      %p178 = por %p176, %p177
      %p179 = scmp.ne.s32.totalorder %s170, %s171
      %p180 = scmp.eq.s32.totalorder %s34, 0
      %p181 = por %p179, %p180
      %p182 = scmp.ne.s32.totalorder %s170, %s171
      %p183 = scmp.eq.s32.totalorder %s35, 1
      %p184 = por %p182, %p183
      %p186 = scmp.ne.s32.totalorder %s171, %s185
      %p187 = scmp.eq.s32.totalorder %s35, 0
      %p188 = por %p186, %p187
      %s190 = sadd.s32 %s189, 1
      %p193 = scmp.eq.s32.totalorder %s29, 1
      %p194 = scmp.ne.s32.totalorder %s189, %s191
      %p195 = scmp.eq.s32.totalorder %s29, 0
      %p196 = por %p194, %p195
      %p197 = scmp.ne.s32.totalorder %s189, %s191
      %p198 = scmp.eq.s32.totalorder %s34, 1
      %p199 = por %p197, %p198
      %p200 = scmp.ne.s32.totalorder %s191, %s192
      %p201 = scmp.eq.s32.totalorder %s34, 0
      %p202 = por %p200, %p201
      %p203 = scmp.ne.s32.totalorder %s191, %s192
      %p204 = scmp.eq.s32.totalorder %s35, 1
      %p205 = por %p203, %p204
      %p207 = scmp.ne.s32.totalorder %s192, %s206
      %p208 = scmp.eq.s32.totalorder %s35, 0
      %p209 = por %p207, %p208
      %s211 = sadd.s32 %s210, 1
      %p214 = scmp.eq.s32.totalorder %s29, 1
      %p215 = scmp.ne.s32.totalorder %s210, %s212
      %p216 = scmp.eq.s32.totalorder %s29, 0
      %p217 = por %p215, %p216
      %p218 = scmp.ne.s32.totalorder %s210, %s212
      %p219 = scmp.eq.s32.totalorder %s34, 1
      %p220 = por %p218, %p219
      %p221 = scmp.ne.s32.totalorder %s212, %s213
      %p222 = scmp.eq.s32.totalorder %s34, 0
      %p223 = por %p221, %p222
      %p224 = scmp.ne.s32.totalorder %s212, %s213
      %p225 = scmp.eq.s32.totalorder %s35, 1
      %p226 = por %p224, %p225
      %p228 = scmp.ne.s32.totalorder %s213, %s227
      %p229 = scmp.eq.s32.totalorder %s35, 0
      %p230 = por %p228, %p229
      %s232 = sadd.s32 %s231, 1
      %p235 = scmp.eq.s32.totalorder %s29, 1
      %p236 = scmp.ne.s32.totalorder %s231, %s233
      %p237 = scmp.eq.s32.totalorder %s29, 0
      %p238 = por %p236, %p237
      %p239 = scmp.ne.s32.totalorder %s231, %s233
      %p240 = scmp.eq.s32.totalorder %s34, 1
      %p241 = por %p239, %p240
      %p242 = scmp.ne.s32.totalorder %s233, %s234
      %p243 = scmp.eq.s32.totalorder %s34, 0
      %p244 = por %p242, %p243
      %p245 = scmp.ne.s32.totalorder %s233, %s234
      %p246 = scmp.eq.s32.totalorder %s35, 1
      %p247 = por %p245, %p246
      %p249 = scmp.ne.s32.totalorder %s234, %s248
      %p250 = scmp.eq.s32.totalorder %s35, 0
      %p251 = por %p249, %p250
      %s253 = sadd.s32 %s252, 1
      %p256 = scmp.eq.s32.totalorder %s29, 1
      %p257 = scmp.ne.s32.totalorder %s252, %s254
      %p258 = scmp.eq.s32.totalorder %s29, 0
      %p259 = por %p257, %p258
      %p260 = scmp.ne.s32.totalorder %s252, %s254
      %p261 = scmp.eq.s32.totalorder %s34, 1
      %p262 = por %p260, %p261
      %p263 = scmp.ne.s32.totalorder %s254, %s255
      %p264 = scmp.eq.s32.totalorder %s34, 0
      %p265 = por %p263, %p264
      %p266 = scmp.ne.s32.totalorder %s254, %s255
      %p267 = scmp.eq.s32.totalorder %s35, 1
      %p268 = por %p266, %p267
      %p270 = scmp.ne.s32.totalorder %s255, %s269
      %p271 = scmp.eq.s32.totalorder %s35, 0
      %p272 = por %p270, %p271
      %s274 = sadd.s32 %s273, 1
      %p277 = scmp.eq.s32.totalorder %s29, 1
      %p278 = scmp.ne.s32.totalorder %s273, %s275
      %p279 = scmp.eq.s32.totalorder %s29, 0
      %p280 = por %p278, %p279
      %p281 = scmp.ne.s32.totalorder %s273, %s275
      %p282 = scmp.eq.s32.totalorder %s34, 1
      %p283 = por %p281, %p282
      %p284 = scmp.ne.s32.totalorder %s275, %s276
      %p285 = scmp.eq.s32.totalorder %s34, 0
      %p286 = por %p284, %p285
      %p287 = scmp.ne.s32.totalorder %s275, %s276
      %p288 = scmp.eq.s32.totalorder %s35, 1
      %p289 = por %p287, %p288
      %p291 = scmp.ne.s32.totalorder %s276, %s290
      %p292 = scmp.eq.s32.totalorder %s35, 0
      %p293 = por %p291, %p292
      %s295 = sadd.s32 %s294, 1
      %p298 = scmp.eq.s32.totalorder %s29, 1
      %p299 = scmp.ne.s32.totalorder %s294, %s296
      %p300 = scmp.eq.s32.totalorder %s29, 0
      %p301 = por %p299, %p300
      %p302 = scmp.ne.s32.totalorder %s294, %s296
      %p303 = scmp.eq.s32.totalorder %s34, 1
      %p304 = por %p302, %p303
      %p305 = scmp.ne.s32.totalorder %s296, %s297
      %p306 = scmp.eq.s32.totalorder %s34, 0
      %p307 = por %p305, %p306
      %p308 = scmp.ne.s32.totalorder %s296, %s297
      %p309 = scmp.eq.s32.totalorder %s35, 1
      %p310 = por %p308, %p309
      %p312 = scmp.ne.s32.totalorder %s297, %s311
      %p313 = scmp.eq.s32.totalorder %s35, 0
      %p314 = por %p312, %p313
      %s316 = sadd.s32 %s315, 1
      %p319 = scmp.eq.s32.totalorder %s29, 1
      %p320 = scmp.ne.s32.totalorder %s315, %s317
      %p321 = scmp.eq.s32.totalorder %s29, 0
      %p322 = por %p320, %p321
      %p323 = scmp.ne.s32.totalorder %s315, %s317
      %p324 = scmp.eq.s32.totalorder %s34, 1
      %p325 = por %p323, %p324
      %p326 = scmp.ne.s32.totalorder %s317, %s318
      %p327 = scmp.eq.s32.totalorder %s34, 0
      %p328 = por %p326, %p327
      %p329 = scmp.ne.s32.totalorder %s317, %s318
      %p330 = scmp.eq.s32.totalorder %s35, 1
      %p331 = por %p329, %p330
      %p333 = scmp.ne.s32.totalorder %s318, %s332
      %p334 = scmp.eq.s32.totalorder %s35, 0
      %p335 = por %p333, %p334
      %s337 = sadd.s32 %s336, 1
      %p340 = scmp.eq.s32.totalorder %s29, 1
      %p341 = scmp.ne.s32.totalorder %s336, %s338
      %p342 = scmp.eq.s32.totalorder %s29, 0
      %p343 = por %p341, %p342
      %p344 = scmp.ne.s32.totalorder %s336, %s338
      %p345 = scmp.eq.s32.totalorder %s34, 1
      %p346 = por %p344, %p345
      %p347 = scmp.ne.s32.totalorder %s338, %s339
      %p348 = scmp.eq.s32.totalorder %s34, 0
      %p349 = por %p347, %p348
      %p350 = scmp.ne.s32.totalorder %s338, %s339
      %p351 = scmp.eq.s32.totalorder %s35, 1
      %p352 = por %p350, %p351
      %p354 = scmp.ne.s32.totalorder %s339, %s353
      %p355 = scmp.eq.s32.totalorder %s35, 0
      %p356 = por %p354, %p355
      %s358 = sadd.s32 %s357, 1
      %p361 = scmp.eq.s32.totalorder %s29, 1
      %p362 = scmp.ne.s32.totalorder %s357, %s359
      %p363 = scmp.eq.s32.totalorder %s29, 0
      %p364 = por %p362, %p363
      %p365 = scmp.ne.s32.totalorder %s357, %s359
      %p366 = scmp.eq.s32.totalorder %s34, 1
      %p367 = por %p365, %p366
      %p368 = scmp.ne.s32.totalorder %s359, %s360
      %p369 = scmp.eq.s32.totalorder %s34, 0
      %p370 = por %p368, %p369
      %p371 = scmp.ne.s32.totalorder %s359, %s360
      %p372 = scmp.eq.s32.totalorder %s35, 1
      %p373 = por %p371, %p372
      %p375 = scmp.ne.s32.totalorder %s360, %s374
      %p376 = scmp.eq.s32.totalorder %s35, 0
      %p377 = por %p375, %p376
      %s379 = sadd.s32 %s378, 1
      %p382 = scmp.eq.s32.totalorder %s29, 1
      %p383 = scmp.ne.s32.totalorder %s378, %s380
      %p384 = scmp.eq.s32.totalorder %s29, 0
      %p385 = por %p383, %p384
      %p386 = scmp.ne.s32.totalorder %s378, %s380
      %p387 = scmp.eq.s32.totalorder %s34, 1
      %p388 = por %p386, %p387
      %p389 = scmp.ne.s32.totalorder %s380, %s381
      %p390 = scmp.eq.s32.totalorder %s34, 0
      %p391 = por %p389, %p390
      %p392 = scmp.ne.s32.totalorder %s380, %s381
      %p393 = scmp.eq.s32.totalorder %s35, 1
      %p394 = por %p392, %p393
      %p396 = scmp.ne.s32.totalorder %s381, %s395
      %p397 = scmp.eq.s32.totalorder %s35, 0
      %p398 = por %p396, %p397
      %s400 = sadd.s32 %s399, 1
      %p403 = scmp.eq.s32.totalorder %s29, 1
      %p404 = scmp.ne.s32.totalorder %s399, %s401
      %p405 = scmp.eq.s32.totalorder %s29, 0
      %p406 = por %p404, %p405
      %p407 = scmp.ne.s32.totalorder %s399, %s401
      %p408 = scmp.eq.s32.totalorder %s34, 1
      %p409 = por %p407, %p408
      %p410 = scmp.ne.s32.totalorder %s401, %s402
      %p411 = scmp.eq.s32.totalorder %s34, 0
      %p412 = por %p410, %p411
      %p413 = scmp.ne.s32.totalorder %s401, %s402
      %p414 = scmp.eq.s32.totalorder %s35, 1
      %p415 = por %p413, %p414
      %p417 = scmp.ne.s32.totalorder %s402, %s416
      %p418 = scmp.eq.s32.totalorder %s35, 0
      %p419 = por %p417, %p418
      %s420 = ssub.s32 %s29, %s36
      %p421 = scmp.eq.s32.totalorder %s420, 0
      %s423 = sadd.s32 %s422, 1
      %s424 = scalar_select %p421, %s422, %s423
      %p427 = pneg %p421
      %p428 = scmp.eq.s32.totalorder %s29, 1
      %p429 = por %p427, %p428
      %p430 = scmp.ne.s32.totalorder %s422, %s425
      %p431 = scmp.eq.s32.totalorder %s29, 0
      %p432 = por %p430, %p431
      %p433 = scmp.ne.s32.totalorder %s422, %s425
      %p434 = scmp.eq.s32.totalorder %s34, 1
      %p435 = por %p433, %p434
      %p436 = scmp.ne.s32.totalorder %s425, %s426
      %p437 = scmp.eq.s32.totalorder %s34, 0
      %p438 = por %p436, %p437
      %p439 = scmp.ne.s32.totalorder %s425, %s426
      %p440 = scmp.eq.s32.totalorder %s35, 1
      %p441 = por %p439, %p440
      %p443 = scmp.ne.s32.totalorder %s426, %s442
      %p444 = scmp.eq.s32.totalorder %s35, 0
      %p445 = por %p443, %p444
      %p446 = scmp.le.s32.totalorder 1, %s29
      %p447 = scmp.lt.s32.totalorder %s29, 3
      %p448 = pnand %p446, %p447
      %p449 = pneg %p448
      // Predicated region
      $region9: #{tpu_custom_call.1} parent=5 // pred_check
        _
      $region10: #{tpu_custom_call.1} parent=5 // pred_check_branch
        %451 = sbr.rel (%p448) target = $region12
      $region11: #{tpu_custom_call.1} parent=5 // pred_region
        %s452 = ssub.s32 %s29, 1
        // Predicated region
        $region13: #{tpu_custom_call.1} parent=11 // pred_check
          %p453 = pneg %p76
        $region14: #{tpu_custom_call.1} parent=11 // pred_check_branch
          %455 = sbr.rel (%p453) target = $region16
        $region15: #{tpu_custom_call.1} parent=11 // pred_region
          _
        $region16: #{tpu_custom_call.1} parent=11 // pred_fallthru
          _
        // Predicated region
        $region17: #{tpu_custom_call.1} parent=11 // pred_check
          %p456 = pneg %p97
        $region18: #{tpu_custom_call.1} parent=11 // pred_check_branch
          %458 = sbr.rel (%p456) target = $region20
        $region19: #{tpu_custom_call.1} parent=11 // pred_region
          _
        $region20: #{tpu_custom_call.1} parent=11 // pred_fallthru
          _
        // Predicated region
        $region21: #{tpu_custom_call.1} parent=11 // pred_check
          %p459 = pneg %p118
        $region22: #{tpu_custom_call.1} parent=11 // pred_check_branch
          %461 = sbr.rel (%p459) target = $region24
        $region23: #{tpu_custom_call.1} parent=11 // pred_region
          _
        $region24: #{tpu_custom_call.1} parent=11 // pred_fallthru
          _
        // Predicated region
        $region25: #{tpu_custom_call.1} parent=11 // pred_check
          %p462 = pneg %p139
        $region26: #{tpu_custom_call.1} parent=11 // pred_check_branch
          %464 = sbr.rel (%p462) target = $region28
        $region27: #{tpu_custom_call.1} parent=11 // pred_region
          %466 = vsyncadd [#allocation3], 0
          %s468 = sshll.u32 %s4, 4
          %s469 = int_to_ptr.hbm [resolvable:$true] %s468
          %s470 = sshll.u32 [#allocation2], 4
          %s471 = int_to_ptr.vmem [resolvable:$true] %s470
          %473 = dma.hbm_to_vmem [thread:$0]  %s469, 16, %s471, [#allocation3]
        $region28: #{tpu_custom_call.1} parent=11 // pred_fallthru
          _
        // Predicated region
        $region29: #{tpu_custom_call.1} parent=11 // pred_check
          %p474 = pneg %p160
        $region30: #{tpu_custom_call.1} parent=11 // pred_check_branch
          %476 = sbr.rel (%p474) target = $region32
        $region31: #{tpu_custom_call.1} parent=11 // pred_region
          _
        $region32: #{tpu_custom_call.1} parent=11 // pred_fallthru
          _
        // Predicated region
        $region33: #{tpu_custom_call.1} parent=11 // pred_check
          %p477 = pneg %p181
        $region34: #{tpu_custom_call.1} parent=11 // pred_check_branch
          %479 = sbr.rel (%p477) target = $region36
        $region35: #{tpu_custom_call.1} parent=11 // pred_region
          %481 = vsyncadd [#allocation6], 0
          %s483 = sshll.u32 %s6, 4
          %s484 = int_to_ptr.hbm [resolvable:$true] %s483
          %s485 = sshll.u32 [#allocation5], 4
          %s486 = int_to_ptr.vmem [resolvable:$true] %s485
          %488 = dma.hbm_to_vmem [thread:$0]  %s484, 16, %s486, [#allocation6]
        $region36: #{tpu_custom_call.1} parent=11 // pred_fallthru
          _
        // Predicated region
        $region37: #{tpu_custom_call.1} parent=11 // pred_check
          %p489 = pneg %p202
        $region38: #{tpu_custom_call.1} parent=11 // pred_check_branch
          %491 = sbr.rel (%p489) target = $region40
        $region39: #{tpu_custom_call.1} parent=11 // pred_region
          _
        $region40: #{tpu_custom_call.1} parent=11 // pred_fallthru
          _
        // Predicated region
        $region41: #{tpu_custom_call.1} parent=11 // pred_check
          %p492 = pneg %p223
        $region42: #{tpu_custom_call.1} parent=11 // pred_check_branch
          %494 = sbr.rel (%p492) target = $region44
        $region43: #{tpu_custom_call.1} parent=11 // pred_region
          %496 = vsyncadd [#allocation6], 0
          %s498 = sshll.u32 %s8, 4
          %s499 = int_to_ptr.hbm [resolvable:$true] %s498
          %s500 = sshll.u32 [#allocation7], 4
          %s501 = int_to_ptr.vmem [resolvable:$true] %s500
          %503 = dma.hbm_to_vmem [thread:$0]  %s499, 16, %s501, [#allocation6]
        $region44: #{tpu_custom_call.1} parent=11 // pred_fallthru
          _
        // Predicated region
        $region45: #{tpu_custom_call.1} parent=11 // pred_check
          %p504 = pneg %p244
        $region46: #{tpu_custom_call.1} parent=11 // pred_check_branch
          %506 = sbr.rel (%p504) target = $region48
        $region47: #{tpu_custom_call.1} parent=11 // pred_region
          _
        $region48: #{tpu_custom_call.1} parent=11 // pred_fallthru
          _
        // Predicated region
        $region49: #{tpu_custom_call.1} parent=11 // pred_check
          %p507 = pneg %p265
        $region50: #{tpu_custom_call.1} parent=11 // pred_check_branch
          %509 = sbr.rel (%p507) target = $region52
        $region51: #{tpu_custom_call.1} parent=11 // pred_region
          _
        $region52: #{tpu_custom_call.1} parent=11 // pred_fallthru
          _
        // Predicated region
        $region53: #{tpu_custom_call.1} parent=11 // pred_check
          %p510 = pneg %p286
        $region54: #{tpu_custom_call.1} parent=11 // pred_check_branch
          %512 = sbr.rel (%p510) target = $region56
        $region55: #{tpu_custom_call.1} parent=11 // pred_region
          _
        $region56: #{tpu_custom_call.1} parent=11 // pred_fallthru
          _
        // Predicated region
        $region57: #{tpu_custom_call.1} parent=11 // pred_check
          %p513 = pneg %p307
        $region58: #{tpu_custom_call.1} parent=11 // pred_check_branch
          %515 = sbr.rel (%p513) target = $region60
        $region59: #{tpu_custom_call.1} parent=11 // pred_region
          _
        $region60: #{tpu_custom_call.1} parent=11 // pred_fallthru
          _
        // Predicated region
        $region61: #{tpu_custom_call.1} parent=11 // pred_check
          %p516 = pneg %p328
        $region62: #{tpu_custom_call.1} parent=11 // pred_check_branch
          %518 = sbr.rel (%p516) target = $region64
        $region63: #{tpu_custom_call.1} parent=11 // pred_region
          _
        $region64: #{tpu_custom_call.1} parent=11 // pred_fallthru
          _
        // Predicated region
        $region65: #{tpu_custom_call.1} parent=11 // pred_check
          %p519 = pneg %p349
        $region66: #{tpu_custom_call.1} parent=11 // pred_check_branch
          %521 = sbr.rel (%p519) target = $region68
        $region67: #{tpu_custom_call.1} parent=11 // pred_region
          _
        $region68: #{tpu_custom_call.1} parent=11 // pred_fallthru
          _
        // Predicated region
        $region69: #{tpu_custom_call.1} parent=11 // pred_check
          %p522 = pneg %p370
        $region70: #{tpu_custom_call.1} parent=11 // pred_check_branch
          %524 = sbr.rel (%p522) target = $region72
        $region71: #{tpu_custom_call.1} parent=11 // pred_region
          _
        $region72: #{tpu_custom_call.1} parent=11 // pred_fallthru
          _
        // Predicated region
        $region73: #{tpu_custom_call.1} parent=11 // pred_check
          %p525 = pneg %p391
        $region74: #{tpu_custom_call.1} parent=11 // pred_check_branch
          %527 = sbr.rel (%p525) target = $region76
        $region75: #{tpu_custom_call.1} parent=11 // pred_region
          _
        $region76: #{tpu_custom_call.1} parent=11 // pred_fallthru
          _
        // Predicated region
        $region77: #{tpu_custom_call.1} parent=11 // pred_check
          %p528 = pneg %p412
        $region78: #{tpu_custom_call.1} parent=11 // pred_check_branch
          %530 = sbr.rel (%p528) target = $region80
        $region79: #{tpu_custom_call.1} parent=11 // pred_region
          _
        $region80: #{tpu_custom_call.1} parent=11 // pred_fallthru
          _
      $region12: #{tpu_custom_call.1} parent=5 // pred_fallthru
        _
      %p531 = scmp.lt.s32.totalorder %s29, 2
      // Predicated region
      $region81: #{tpu_custom_call.1} parent=5 // pred_check
        %p532 = pneg %p531
      $region82: #{tpu_custom_call.1} parent=5 // pred_check_branch
        %534 = sbr.rel (%p532) target = $region84
      $region83: #{tpu_custom_call.1} parent=5 // pred_region
        // Predicated region
        $region85: #{tpu_custom_call.1} parent=83 // pred_check
          %p535 = pneg %p49
        $region86: #{tpu_custom_call.1} parent=83 // pred_check_branch
          %537 = sbr.rel (%p535) target = $region88
        $region87: #{tpu_custom_call.1} parent=83 // pred_region
          %s538 = smul.u32 4, %s29
          %p539 = scmp.lt.s32.totalorder %s538, 7
          %s540 = scalar_select %p539, %s538, 7
          %s541 = smul.addr %s540, 8
          %s542 = scalar_lea.vmem %s0, %s541
          %s543 = smul.u32 4, %s29
        $region88: #{tpu_custom_call.1} parent=83 // pred_fallthru
          _
      $region84: #{tpu_custom_call.1} parent=5 // pred_fallthru
        _
      %p544 = scmp.le.s32.totalorder 1, %s29
      %p545 = scmp.lt.s32.totalorder %s29, 3
      %p546 = pnand %p544, %p545
      %p547 = pneg %p546
      // Predicated region
      $region89: #{tpu_custom_call.1} parent=5 // pred_check
        _
      $region90: #{tpu_custom_call.1} parent=5 // pred_check_branch
        %549 = sbr.rel (%p546) target = $region92
      $region91: #{tpu_custom_call.1} parent=5 // pred_region
        %s550 = ssub.s32 %s29, 1
        // Predicated region
        $region93: #{tpu_custom_call.1} parent=91 // pred_check
          %p551 = pneg %p139
        $region94: #{tpu_custom_call.1} parent=91 // pred_check_branch
          %553 = sbr.rel (%p551) target = $region96
        $region95: #{tpu_custom_call.1} parent=91 // pred_region
          %555 = dma.done [#allocation3], 16
        $region96: #{tpu_custom_call.1} parent=91 // pred_fallthru
          _
        // Predicated region
        $region97: #{tpu_custom_call.1} parent=91 // pred_check
          %p556 = pneg %p181
        $region98: #{tpu_custom_call.1} parent=91 // pred_check_branch
          %558 = sbr.rel (%p556) target = $region100
        $region99: #{tpu_custom_call.1} parent=91 // pred_region
          %560 = dma.done [#allocation6], 16
        $region100: #{tpu_custom_call.1} parent=91 // pred_fallthru
          _
        // Predicated region
        $region101: #{tpu_custom_call.1} parent=91 // pred_check
          %p561 = pneg %p223
        $region102: #{tpu_custom_call.1} parent=91 // pred_check_branch
          %563 = sbr.rel (%p561) target = $region104
        $region103: #{tpu_custom_call.1} parent=91 // pred_region
          %565 = dma.done [#allocation6], 16
        $region104: #{tpu_custom_call.1} parent=91 // pred_fallthru
          _
        %s566 = smul.u32 4, %s34
        %p567 = scmp.lt.s32.totalorder %s566, 7
        %s568 = scalar_select %p567, %s566, 7
        %s569 = smul.addr %s568, 8
        %s570 = scalar_lea.vmem %s0, %s569
        %p571 = pneg %p55
        %p572 = pneg %p52
        %p573 = pneg %p76
        %p574 = pneg %p73
        %p575 = pneg %p97
        %p576 = pneg %p94
        %p577 = pneg %p118
        %p578 = pneg %p115
        %p579 = pneg %p139
        %p580 = pneg %p136
        %p581 = pneg %p160
        %p582 = pneg %p157
        %p583 = pneg %p181
        %p584 = pneg %p178
        %p585 = pneg %p202
        %p586 = pneg %p199
        %p587 = pneg %p223
        %p588 = pneg %p220
        %p589 = pneg %p244
        %p590 = pneg %p241
        %p591 = pneg %p265
        %p592 = pneg %p262
        %p593 = pneg %p286
        %p594 = pneg %p283
        %p595 = pneg %p307
        %p596 = pneg %p304
        %p597 = pneg %p328
        %p598 = pneg %p325
        %p599 = pneg %p349
        %p600 = pneg %p346
        %p601 = pneg %p370
        %p602 = pneg %p367
        %p603 = pneg %p391
        %p604 = pneg %p388
        %p605 = pneg %p412
        %p606 = pneg %p409
        %p607 = pneg %p438
        %p608 = pneg %p435
        %s609 = sand.u32 %s425, 1
        %s610 = scalar_lea.sflag [#allocation4], %s609
        %s611 = sand.u32 %s425, 1
        %s612 = scalar_lea.vmem [#allocation8], %s611
        %s613 = smul.u32 4, %s34
        %p614 = scmp.lt.s32.totalorder %s613, 7
        %s615 = scalar_select %p614, %s613, 7
        %s616 = smul.addr %s615, 8
        %s617 = scalar_lea.vmem %s0, %s616
        %s618 = smul.u32 4, %s34
        %v620 = vld [vmem:[%s617] sm:$0xff]
        %v621 = vld [vmem:[%s617 + $0x8] sm:$0xff]
        %v622 = vld [vmem:[%s617 + $0x10] sm:$0xff]
        %v623 = vld [vmem:[%s617 + $0x18] sm:$0xff]
        %v624 = vpack.c.bf16 %v621, %v620
        %v625 = vpack.c.bf16 %v623, %v622
        %v626 = vld [vmem:[%s1] sm:$0xf]
        %v627 = vld [vmem:[%s1 + $0x4] sm:$0xf]
        %v628 = vld [vmem:[%s1 + $0x8] sm:$0xf]
        %v629 = vrot.slane %v620, 1
        %v630 = vrot.slane %v621, 1
        %v631 = vrot.slane %v622, 1
        %v632 = vrot.slane %v623, 1
        %v633 = vlaneseq
        %v634 = vshrl.u32 %v633, 7
        %vm635 = vcmp.lt.s32.totalorder %v634, 7
        %v636 = vsel %vm635, %v631, %v632
        %v637 = vsel %vm635, %v630, %v631
        %v638 = vsel %vm635, %v629, %v630
        %v639 = vsel %vm635, %v632, %v629
        %v640 = vpack.c.bf16 %v637, %v638
        %v641 = vpack.c.bf16 %v639, %v636
        %s642 = scalar_lea.vmem %s1, 12
        %v643 = vld [vmem:[%s642] sm:$0xf]
        %v644 = vld [vmem:[%s642 + $0x4] sm:$0xf]
        %v645 = vld [vmem:[%s642 + $0x8] sm:$0xf]
        %v649 = vunpack.c.l.b16 %v643
        %v650 = vunpack.c.l.b16 %v644
        %v651 = vunpack.c.l.b16 %v645
        %v652 = vpack.c.b16 %v650, %v649
        %v653 = vpack.c.b16 %v651, %v651
        %vm655 = vcmask 195584
        %v657 = vsel %vm655, %v640, 0
        %v660 = vsel %vm655, %v641, 0
        %vm662 = vcmask 1043456
        %v664 = vsel %vm662, %v653, 0
        %666 = vmatpush.bf16.msra.mxu0 0
        %667 = vmatpush.bf16.msra.mxu0 0
        %668 = vmatpush.bf16.msra.mxu0 0
        %669 = vmatpush.bf16.msra.mxu0 0
        %670 = vmatpush.bf16.msra.mxu0 0
        %671 = vmatpush.bf16.msra.mxu0 0
        %672 = vmatpush.bf16.msra.mxu0 %v664
        %673 = vmatpush.bf16.msra.mxu0 %v652
        %674 = vmatmul.bf16.gmra.mxu0 %v657
        %v675 = vpop.f32.mrf.mxu0
        %v676 = vadd.f32 0.0, %v675
        %v677 = vpop.f32.mrf.mxu0
        %v678 = vadd.f32 0.0, %v677
        %679 = vmatmul.bf16.gmra.mxu0 %v660
        %v680 = vpop.f32.mrf.mxu0
        %v681 = vadd.f32 0.0, %v680
        %v682 = vpop.f32.mrf.mxu0
        %v683 = vadd.f32 0.0, %v682
        %684 = vdwg.mxu0
        %v688 = vunpack.c.l.b16 %v626
        %v689 = vunpack.c.l.b16 %v627
        %v690 = vunpack.c.l.b16 %v628
        %v691 = vpack.c.b16 %v689, %v688
        %v692 = vpack.c.b16 %v690, %v690
        %v695 = vsel %vm655, %v624, 0
        %v698 = vsel %vm655, %v625, 0
        %v701 = vsel %vm662, %v692, 0
        %703 = vmatpush.bf16.msra.mxu0 0
        %704 = vmatpush.bf16.msra.mxu0 0
        %705 = vmatpush.bf16.msra.mxu0 0
        %706 = vmatpush.bf16.msra.mxu0 0
        %707 = vmatpush.bf16.msra.mxu0 0
        %708 = vmatpush.bf16.msra.mxu0 0
        %709 = vmatpush.bf16.msra.mxu0 %v701
        %710 = vmatpush.bf16.msra.mxu0 %v691
        %711 = vmatmul.bf16.gmra.mxu0 %v695
        %v712 = vpop.f32.mrf.mxu0
        %v713 = vadd.f32 %v676, %v712
        %v714 = vpop.f32.mrf.mxu0
        %v715 = vadd.f32 %v678, %v714
        %716 = vmatmul.bf16.gmra.mxu0 %v698
        %v717 = vpop.f32.mrf.mxu0
        %v718 = vadd.f32 %v681, %v717
        %v719 = vpop.f32.mrf.mxu0
        %v720 = vadd.f32 %v683, %v719
        %721 = vdwg.mxu0
        %v722 = vrot.slane %v620, 2
        %v723 = vrot.slane %v621, 2
        %v724 = vrot.slane %v622, 2
        %v725 = vrot.slane %v623, 2
        %vm726 = vcmp.lt.s32.totalorder %v634, 6
        %v727 = vsel %vm726, %v724, %v725
        %v728 = vsel %vm726, %v723, %v724
        %v729 = vsel %vm726, %v722, %v723
        %v730 = vsel %vm726, %v725, %v722
        %v731 = vpack.c.bf16 %v728, %v729
        %v732 = vpack.c.bf16 %v730, %v727
        %s733 = scalar_lea.vmem %s1, 24
        %v734 = vld [vmem:[%s733] sm:$0xf]
        %v735 = vld [vmem:[%s733 + $0x4] sm:$0xf]
        %v736 = vld [vmem:[%s733 + $0x8] sm:$0xf]
        %v740 = vunpack.c.l.b16 %v734
        %v741 = vunpack.c.l.b16 %v735
        %v742 = vunpack.c.l.b16 %v736
        %v743 = vpack.c.b16 %v741, %v740
        %v744 = vpack.c.b16 %v742, %v742
        %v747 = vsel %vm655, %v731, 0
        %v750 = vsel %vm655, %v732, 0
        %v753 = vsel %vm662, %v744, 0
        %755 = vmatpush.bf16.msra.mxu0 0
        %756 = vmatpush.bf16.msra.mxu0 0
        %757 = vmatpush.bf16.msra.mxu0 0
        %758 = vmatpush.bf16.msra.mxu0 0
        %759 = vmatpush.bf16.msra.mxu0 0
        %760 = vmatpush.bf16.msra.mxu0 0
        %761 = vmatpush.bf16.msra.mxu0 %v753
        %762 = vmatpush.bf16.msra.mxu0 %v743
        %763 = vmatmul.bf16.gmra.mxu0 %v747
        %v764 = vpop.f32.mrf.mxu0
        %v765 = vadd.f32 0.0, %v764
        %v766 = vpop.f32.mrf.mxu0
        %v767 = vadd.f32 0.0, %v766
        %768 = vmatmul.bf16.gmra.mxu0 %v750
        %v769 = vpop.f32.mrf.mxu0
        %v770 = vadd.f32 0.0, %v769
        %v771 = vpop.f32.mrf.mxu0
        %v772 = vadd.f32 0.0, %v771
        %773 = vdwg.mxu0
        %v774 = vadd.f32 %v713, %v765
        %v775 = vadd.f32 %v715, %v767
        %v776 = vadd.f32 %v718, %v770
        %v777 = vadd.f32 %v720, %v772
        %v778 = vrot.slane %v620, 3
        %v779 = vrot.slane %v621, 3
        %v780 = vrot.slane %v622, 3
        %v781 = vrot.slane %v623, 3
        %vm782 = vcmp.lt.s32.totalorder %v634, 5
        %v783 = vsel %vm782, %v780, %v781
        %v784 = vsel %vm782, %v779, %v780
        %v785 = vsel %vm782, %v778, %v779
        %v786 = vsel %vm782, %v781, %v778
        %v787 = vpack.c.bf16 %v784, %v785
        %v788 = vpack.c.bf16 %v786, %v783
        %s789 = scalar_lea.vmem %s1, 36
        %v790 = vld [vmem:[%s789] sm:$0xf]
        %v791 = vld [vmem:[%s789 + $0x4] sm:$0xf]
        %v792 = vld [vmem:[%s789 + $0x8] sm:$0xf]
        %v796 = vunpack.c.l.b16 %v790
        %v797 = vunpack.c.l.b16 %v791
        %v798 = vunpack.c.l.b16 %v792
        %v799 = vpack.c.b16 %v797, %v796
        %v800 = vpack.c.b16 %v798, %v798
        %v803 = vsel %vm655, %v787, 0
        %v806 = vsel %vm655, %v788, 0
        %v809 = vsel %vm662, %v800, 0
        %811 = vmatpush.bf16.msra.mxu0 0
        %812 = vmatpush.bf16.msra.mxu0 0
        %813 = vmatpush.bf16.msra.mxu0 0
        %814 = vmatpush.bf16.msra.mxu0 0
        %815 = vmatpush.bf16.msra.mxu0 0
        %816 = vmatpush.bf16.msra.mxu0 0
        %817 = vmatpush.bf16.msra.mxu0 %v809
        %818 = vmatpush.bf16.msra.mxu0 %v799
        %819 = vmatmul.bf16.gmra.mxu0 %v803
        %v820 = vpop.f32.mrf.mxu0
        %v821 = vadd.f32 0.0, %v820
        %v822 = vpop.f32.mrf.mxu0
        %v823 = vadd.f32 0.0, %v822
        %824 = vmatmul.bf16.gmra.mxu0 %v806
        %v825 = vpop.f32.mrf.mxu0
        %v826 = vadd.f32 0.0, %v825
        %v827 = vpop.f32.mrf.mxu0
        %v828 = vadd.f32 0.0, %v827
        %829 = vdwg.mxu0
        %v830 = vadd.f32 %v774, %v821
        %v831 = vadd.f32 %v775, %v823
        %v832 = vadd.f32 %v776, %v826
        %v833 = vadd.f32 %v777, %v828
        %v834 = vrot.slane %v620, 4
        %v835 = vrot.slane %v621, 4
        %v836 = vrot.slane %v622, 4
        %v837 = vrot.slane %v623, 4
        %vm838 = vcmp.lt.s32.totalorder %v634, 4
        %v839 = vsel %vm838, %v836, %v837
        %v840 = vsel %vm838, %v835, %v836
        %v841 = vsel %vm838, %v834, %v835
        %v842 = vsel %vm838, %v837, %v834
        %v843 = vpack.c.bf16 %v840, %v841
        %v844 = vpack.c.bf16 %v842, %v839
        %s845 = scalar_lea.vmem %s1, 48
        %v846 = vld [vmem:[%s845] sm:$0xf]
        %v847 = vld [vmem:[%s845 + $0x4] sm:$0xf]
        %v848 = vld [vmem:[%s845 + $0x8] sm:$0xf]
        %v852 = vunpack.c.l.b16 %v846
        %v853 = vunpack.c.l.b16 %v847
        %v854 = vunpack.c.l.b16 %v848
        %v855 = vpack.c.b16 %v853, %v852
        %v856 = vpack.c.b16 %v854, %v854
        %v859 = vsel %vm655, %v843, 0
        %v862 = vsel %vm655, %v844, 0
        %v865 = vsel %vm662, %v856, 0
        %867 = vmatpush.bf16.msra.mxu0 0
        %868 = vmatpush.bf16.msra.mxu0 0
        %869 = vmatpush.bf16.msra.mxu0 0
        %870 = vmatpush.bf16.msra.mxu0 0
        %871 = vmatpush.bf16.msra.mxu0 0
        %872 = vmatpush.bf16.msra.mxu0 0
        %873 = vmatpush.bf16.msra.mxu0 %v865
        %874 = vmatpush.bf16.msra.mxu0 %v855
        %875 = vmatmul.bf16.gmra.mxu0 %v859
        %v876 = vpop.f32.mrf.mxu0
        %v877 = vadd.f32 0.0, %v876
        %v878 = vpop.f32.mrf.mxu0
        %v879 = vadd.f32 0.0, %v878
        %880 = vmatmul.bf16.gmra.mxu0 %v862
        %v881 = vpop.f32.mrf.mxu0
        %v882 = vadd.f32 0.0, %v881
        %v883 = vpop.f32.mrf.mxu0
        %v884 = vadd.f32 0.0, %v883
        %885 = vdwg.mxu0
        %v886 = vadd.f32 %v830, %v877
        %v887 = vadd.f32 %v831, %v879
        %v888 = vadd.f32 %v832, %v882
        %v889 = vadd.f32 %v833, %v884
        %v890 = vld [vmem:[%s2] sm:$0x1]
        %v892 = vperm.slane %v890, 0
        %v894 = vadd.f32 %v886, %v892
        %v895 = vadd.f32 %v887, %v892
        %v896 = vadd.f32 %v888, %v892
        %v897 = vadd.f32 %v889, %v892
        %v898 = vmax.f32 %v894, 0.0
        %v899 = vmax.f32 %v895, 0.0
        %v900 = vmax.f32 %v896, 0.0
        %v901 = vmax.f32 %v897, 0.0
        %v902 = vpack.c.bf16 %v899, %v898
        %v903 = vpack.c.bf16 %v901, %v900
        %v904 = vld [vmem:[%s3] sm:$0xf]
        %v905 = vld [vmem:[%s3 + $0x4] sm:$0xf]
        %v906 = vld [vmem:[%s3 + $0x8] sm:$0xf]
        %v907 = vld [vmem:[%s3 + $0xc] sm:$0xf]
        %v908 = vrot.slane %v898, 3
        %v909 = vrot.slane %v899, 3
        %v910 = vrot.slane %v900, 3
        %v911 = vrot.slane %v901, 3
        %v912 = vsel %vm782, %v910, %v911
        %v913 = vsel %vm782, %v909, %v910
        %v914 = vsel %vm782, %v908, %v909
        %v915 = vsel %vm782, %v911, %v908
        %v916 = vpack.c.bf16 %v913, %v914
        %v917 = vpack.c.bf16 %v915, %v912
        %s918 = scalar_lea.vmem %s3, 16
        %v919 = vld [vmem:[%s918] sm:$0xf]
        %v920 = vld [vmem:[%s918 + $0x4] sm:$0xf]
        %v921 = vld [vmem:[%s918 + $0x8] sm:$0xf]
        %v922 = vld [vmem:[%s918 + $0xc] sm:$0xf]
        %v927 = vunpack.c.l.b16 %v919
        %v928 = vunpack.c.l.b16 %v920
        %v929 = vunpack.c.l.b16 %v921
        %v930 = vunpack.c.l.b16 %v922
        %v931 = vpack.c.b16 %v928, %v927
        %v932 = vpack.c.b16 %v930, %v929
        %vm935 = vcmask 261120
        %v937 = vsel %vm935, %v916, 0
        %v940 = vsel %vm935, %v917, 0
        %942 = vmatpush.bf16.msra.mxu0 0
        %943 = vmatpush.bf16.msra.mxu0 0
        %944 = vmatpush.bf16.msra.mxu0 0
        %945 = vmatpush.bf16.msra.mxu0 0
        %946 = vmatpush.bf16.msra.mxu0 0
        %947 = vmatpush.bf16.msra.mxu0 0
        %948 = vmatpush.bf16.msra.mxu0 %v932
        %949 = vmatpush.bf16.msra.mxu0 %v931
        %950 = vmatmul.bf16.gmra.mxu0 %v937
        %v951 = vpop.f32.mrf.mxu0
        %v952 = vadd.f32 0.0, %v951
        %v953 = vpop.f32.mrf.mxu0
        %v954 = vadd.f32 0.0, %v953
        %955 = vmatmul.bf16.gmra.mxu0 %v940
        %v956 = vpop.f32.mrf.mxu0
        %v957 = vadd.f32 0.0, %v956
        %v958 = vpop.f32.mrf.mxu0
        %v959 = vadd.f32 0.0, %v958
        %960 = vdwg.mxu0
        %v965 = vunpack.c.l.b16 %v904
        %v966 = vunpack.c.l.b16 %v905
        %v967 = vunpack.c.l.b16 %v906
        %v968 = vunpack.c.l.b16 %v907
        %v969 = vpack.c.b16 %v966, %v965
        %v970 = vpack.c.b16 %v968, %v967
        %v974 = vsel %vm935, %v902, 0
        %v977 = vsel %vm935, %v903, 0
        %979 = vmatpush.bf16.msra.mxu0 0
        %980 = vmatpush.bf16.msra.mxu0 0
        %981 = vmatpush.bf16.msra.mxu0 0
        %982 = vmatpush.bf16.msra.mxu0 0
        %983 = vmatpush.bf16.msra.mxu0 0
        %984 = vmatpush.bf16.msra.mxu0 0
        %985 = vmatpush.bf16.msra.mxu0 %v970
        %986 = vmatpush.bf16.msra.mxu0 %v969
        %987 = vmatmul.bf16.gmra.mxu0 %v974
        %v988 = vpop.f32.mrf.mxu0
        %v989 = vadd.f32 %v952, %v988
        %v990 = vpop.f32.mrf.mxu0
        %v991 = vadd.f32 %v954, %v990
        %992 = vmatmul.bf16.gmra.mxu0 %v977
        %v993 = vpop.f32.mrf.mxu0
        %v994 = vadd.f32 %v957, %v993
        %v995 = vpop.f32.mrf.mxu0
        %v996 = vadd.f32 %v959, %v995
        %997 = vdwg.mxu0
        %v998 = vrot.slane %v898, 6
        %v999 = vrot.slane %v899, 6
        %v1000 = vrot.slane %v900, 6
        %v1001 = vrot.slane %v901, 6
        %vm1002 = vcmp.lt.s32.totalorder %v634, 2
        %v1003 = vsel %vm1002, %v1000, %v1001
        %v1004 = vsel %vm1002, %v999, %v1000
        %v1005 = vsel %vm1002, %v998, %v999
        %v1006 = vsel %vm1002, %v1001, %v998
        %v1007 = vpack.c.bf16 %v1004, %v1005
        %v1008 = vpack.c.bf16 %v1006, %v1003
        %s1009 = scalar_lea.vmem %s3, 32
        %v1010 = vld [vmem:[%s1009] sm:$0xf]
        %v1011 = vld [vmem:[%s1009 + $0x4] sm:$0xf]
        %v1012 = vld [vmem:[%s1009 + $0x8] sm:$0xf]
        %v1013 = vld [vmem:[%s1009 + $0xc] sm:$0xf]
        %v1018 = vunpack.c.l.b16 %v1010
        %v1019 = vunpack.c.l.b16 %v1011
        %v1020 = vunpack.c.l.b16 %v1012
        %v1021 = vunpack.c.l.b16 %v1013
        %v1022 = vpack.c.b16 %v1019, %v1018
        %v1023 = vpack.c.b16 %v1021, %v1020
        %v1027 = vsel %vm935, %v1007, 0
        %v1030 = vsel %vm935, %v1008, 0
        %1032 = vmatpush.bf16.msra.mxu0 0
        %1033 = vmatpush.bf16.msra.mxu0 0
        %1034 = vmatpush.bf16.msra.mxu0 0
        %1035 = vmatpush.bf16.msra.mxu0 0
        %1036 = vmatpush.bf16.msra.mxu0 0
        %1037 = vmatpush.bf16.msra.mxu0 0
        %1038 = vmatpush.bf16.msra.mxu0 %v1023
        %1039 = vmatpush.bf16.msra.mxu0 %v1022
        %1040 = vmatmul.bf16.gmra.mxu0 %v1027
        %v1041 = vpop.f32.mrf.mxu0
        %v1042 = vadd.f32 0.0, %v1041
        %v1043 = vpop.f32.mrf.mxu0
        %v1044 = vadd.f32 0.0, %v1043
        %1045 = vmatmul.bf16.gmra.mxu0 %v1030
        %v1046 = vpop.f32.mrf.mxu0
        %v1047 = vadd.f32 0.0, %v1046
        %v1048 = vpop.f32.mrf.mxu0
        %v1049 = vadd.f32 0.0, %v1048
        %1050 = vdwg.mxu0
        %v1051 = vadd.f32 %v989, %v1042
        %v1052 = vadd.f32 %v991, %v1044
        %v1053 = vadd.f32 %v994, %v1047
        %v1054 = vadd.f32 %v996, %v1049
        %v1055 = vld [vmem:[#allocation2] sm:$0x1]
        %v1057 = vperm.slane %v1055, 0
        %v1059 = vadd.f32 %v1051, %v1057
        %v1060 = vadd.f32 %v1052, %v1057
        %v1061 = vadd.f32 %v1053, %v1057
        %v1062 = vadd.f32 %v1054, %v1057
        %v1063 = vmax.f32 %v1059, 0.0
        %v1064 = vmax.f32 %v1060, 0.0
        %v1065 = vmax.f32 %v1061, 0.0
        %v1066 = vmax.f32 %v1062, 0.0
        %v1067 = vpack.c.bf16 %v1064, %v1063
        %v1068 = vpack.c.bf16 %v1066, %v1065
        %v1069 = vld [vmem:[%s5] sm:$0xf]
        %v1070 = vld [vmem:[%s5 + $0x4] sm:$0xf]
        %v1071 = vld [vmem:[%s5 + $0x8] sm:$0xf]
        %v1072 = vld [vmem:[%s5 + $0xc] sm:$0xf]
        %v1073 = vrot.slane %v1063, 4
        %v1074 = vrot.slane %v1064, 4
        %v1075 = vrot.slane %v1065, 4
        %v1076 = vrot.slane %v1066, 4
        %v1077 = vsel %vm838, %v1075, %v1076
        %v1078 = vsel %vm838, %v1074, %v1075
        %v1079 = vsel %vm838, %v1073, %v1074
        %v1080 = vsel %vm838, %v1076, %v1073
        %v1081 = vpack.c.bf16 %v1078, %v1079
        %v1082 = vpack.c.bf16 %v1080, %v1077
        %s1083 = scalar_lea.vmem %s5, 16
        %v1084 = vld [vmem:[%s1083] sm:$0xf]
        %v1085 = vld [vmem:[%s1083 + $0x4] sm:$0xf]
        %v1086 = vld [vmem:[%s1083 + $0x8] sm:$0xf]
        %v1087 = vld [vmem:[%s1083 + $0xc] sm:$0xf]
        %v1092 = vunpack.c.l.b16 %v1084
        %v1093 = vunpack.c.l.b16 %v1085
        %v1094 = vunpack.c.l.b16 %v1086
        %v1095 = vunpack.c.l.b16 %v1087
        %v1096 = vpack.c.b16 %v1093, %v1092
        %v1097 = vpack.c.b16 %v1095, %v1094
        %v1101 = vsel %vm935, %v1081, 0
        %v1104 = vsel %vm935, %v1082, 0
        %1106 = vmatpush.bf16.msra.mxu0 0
        %1107 = vmatpush.bf16.msra.mxu0 0
        %1108 = vmatpush.bf16.msra.mxu0 0
        %1109 = vmatpush.bf16.msra.mxu0 0
        %1110 = vmatpush.bf16.msra.mxu0 0
        %1111 = vmatpush.bf16.msra.mxu0 0
        %1112 = vmatpush.bf16.msra.mxu0 %v1097
        %1113 = vmatpush.bf16.msra.mxu0 %v1096
        %1114 = vmatmul.bf16.gmra.mxu0 %v1101
        %v1115 = vpop.f32.mrf.mxu0
        %v1116 = vadd.f32 0.0, %v1115
        %v1117 = vpop.f32.mrf.mxu0
        %v1118 = vadd.f32 0.0, %v1117
        %1119 = vmatmul.bf16.gmra.mxu0 %v1104
        %v1120 = vpop.f32.mrf.mxu0
        %v1121 = vadd.f32 0.0, %v1120
        %v1122 = vpop.f32.mrf.mxu0
        %v1123 = vadd.f32 0.0, %v1122
        %1124 = vdwg.mxu0
        %v1129 = vunpack.c.l.b16 %v1069
        %v1130 = vunpack.c.l.b16 %v1070
        %v1131 = vunpack.c.l.b16 %v1071
        %v1132 = vunpack.c.l.b16 %v1072
        %v1133 = vpack.c.b16 %v1130, %v1129
        %v1134 = vpack.c.b16 %v1132, %v1131
        %v1138 = vsel %vm935, %v1067, 0
        %v1141 = vsel %vm935, %v1068, 0
        %1143 = vmatpush.bf16.msra.mxu0 0
        %1144 = vmatpush.bf16.msra.mxu0 0
        %1145 = vmatpush.bf16.msra.mxu0 0
        %1146 = vmatpush.bf16.msra.mxu0 0
        %1147 = vmatpush.bf16.msra.mxu0 0
        %1148 = vmatpush.bf16.msra.mxu0 0
        %1149 = vmatpush.bf16.msra.mxu0 %v1134
        %1150 = vmatpush.bf16.msra.mxu0 %v1133
        %1151 = vmatmul.bf16.gmra.mxu0 %v1138
        %v1152 = vpop.f32.mrf.mxu0
        %v1153 = vadd.f32 %v1116, %v1152
        %v1154 = vpop.f32.mrf.mxu0
        %v1155 = vadd.f32 %v1118, %v1154
        %1156 = vmatmul.bf16.gmra.mxu0 %v1141
        %v1157 = vpop.f32.mrf.mxu0
        %v1158 = vadd.f32 %v1121, %v1157
        %v1159 = vpop.f32.mrf.mxu0
        %v1160 = vadd.f32 %v1123, %v1159
        %1161 = vdwg.mxu0
        %v1162 = vpack.c.bf16 %v1065, %v1064
        %v1163 = vpack.c.bf16 %v1063, %v1066
        %s1164 = scalar_lea.vmem %s5, 32
        %v1165 = vld [vmem:[%s1164] sm:$0xf]
        %v1166 = vld [vmem:[%s1164 + $0x4] sm:$0xf]
        %v1167 = vld [vmem:[%s1164 + $0x8] sm:$0xf]
        %v1168 = vld [vmem:[%s1164 + $0xc] sm:$0xf]
        %v1173 = vunpack.c.l.b16 %v1165
        %v1174 = vunpack.c.l.b16 %v1166
        %v1175 = vunpack.c.l.b16 %v1167
        %v1176 = vunpack.c.l.b16 %v1168
        %v1177 = vpack.c.b16 %v1174, %v1173
        %v1178 = vpack.c.b16 %v1176, %v1175
        %v1182 = vsel %vm935, %v1162, 0
        %v1185 = vsel %vm935, %v1163, 0
        %1187 = vmatpush.bf16.msra.mxu0 0
        %1188 = vmatpush.bf16.msra.mxu0 0
        %1189 = vmatpush.bf16.msra.mxu0 0
        %1190 = vmatpush.bf16.msra.mxu0 0
        %1191 = vmatpush.bf16.msra.mxu0 0
        %1192 = vmatpush.bf16.msra.mxu0 0
        %1193 = vmatpush.bf16.msra.mxu0 %v1178
        %1194 = vmatpush.bf16.msra.mxu0 %v1177
        %1195 = vmatmul.bf16.gmra.mxu0 %v1182
        %v1196 = vpop.f32.mrf.mxu0
        %v1197 = vadd.f32 0.0, %v1196
        %v1198 = vpop.f32.mrf.mxu0
        %v1199 = vadd.f32 0.0, %v1198
        %1200 = vmatmul.bf16.gmra.mxu0 %v1185
        %v1201 = vpop.f32.mrf.mxu0
        %v1202 = vadd.f32 0.0, %v1201
        %v1203 = vpop.f32.mrf.mxu0
        %v1204 = vadd.f32 0.0, %v1203
        %1205 = vdwg.mxu0
        %v1206 = vadd.f32 %v1153, %v1197
        %v1207 = vadd.f32 %v1155, %v1199
        %v1208 = vadd.f32 %v1158, %v1202
        %v1209 = vadd.f32 %v1160, %v1204
        %v1210 = vld [vmem:[#allocation5] sm:$0x1]
        %v1212 = vperm.slane %v1210, 0
        %v1214 = vadd.f32 %v1206, %v1212
        %v1215 = vadd.f32 %v1207, %v1212
        %v1216 = vadd.f32 %v1208, %v1212
        %v1217 = vadd.f32 %v1209, %v1212
        %v1218 = vmax.f32 %v1214, 0.0
        %v1219 = vmax.f32 %v1215, 0.0
        %v1220 = vmax.f32 %v1216, 0.0
        %v1221 = vmax.f32 %v1217, 0.0
        %v1222 = vpack.c.bf16 %v1219, %v1218
        %v1223 = vpack.c.bf16 %v1221, %v1220
        %v1224 = vld [vmem:[%s7] sm:$0xf]
        %v1225 = vld [vmem:[%s7 + $0x4] sm:$0xf]
        %v1226 = vld [vmem:[%s7 + $0x8] sm:$0xf]
        %v1227 = vld [vmem:[%s7 + $0xc] sm:$0xf]
        %v1228 = vld [vmem:[#allocation7] sm:$0x1]
        %v1230 = vperm.slane %v1228, 0
        %v1236 = vunpack.c.l.b16 %v1224
        %v1237 = vunpack.c.l.b16 %v1225
        %v1238 = vunpack.c.l.b16 %v1226
        %v1239 = vunpack.c.l.b16 %v1227
        %v1240 = vpack.c.b16 %v1237, %v1236
        %v1241 = vpack.c.b16 %v1239, %v1238
        %v1245 = vsel %vm935, %v1222, 0
        %v1248 = vsel %vm935, %v1223, 0
        %1250 = vmatpush.bf16.msra.mxu0 0
        %1251 = vmatpush.bf16.msra.mxu0 0
        %1252 = vmatpush.bf16.msra.mxu0 0
        %1253 = vmatpush.bf16.msra.mxu0 0
        %1254 = vmatpush.bf16.msra.mxu0 0
        %1255 = vmatpush.bf16.msra.mxu0 0
        %1256 = vmatpush.bf16.msra.mxu0 %v1241
        %1257 = vmatpush.bf16.msra.mxu0 %v1240
        %1258 = vmatmul.bf16.gmra.mxu0 %v1245
        %v1259 = vpop.f32.mrf.mxu0
        %v1260 = vadd.f32 %v1230, %v1259
        %v1261 = vpop.f32.mrf.mxu0
        %v1262 = vadd.f32 %v1230, %v1261
        %1263 = vmatmul.bf16.gmra.mxu0 %v1248
        %v1264 = vpop.f32.mrf.mxu0
        %v1265 = vadd.f32 %v1230, %v1264
        %v1266 = vpop.f32.mrf.mxu0
        %v1267 = vadd.f32 %v1230, %v1266
        %1268 = vdwg.mxu0
        %v1269 = vmax.f32 %v1260, 0.0
        %v1270 = vmax.f32 %v1262, 0.0
        %v1271 = vmax.f32 %v1265, 0.0
        %v1272 = vmax.f32 %v1267, 0.0
        %v1273 = vpack.c.bf16 %v1270, %v1269
        %v1274 = vpack.c.bf16 %v1272, %v1271
        %v1275 = vld [vmem:[%s9] sm:$0xf]
        %v1276 = vld [vmem:[%s9 + $0x4] sm:$0xf]
        %v1277 = vld [vmem:[%s9 + $0x8] sm:$0xf]
        %v1278 = vld [vmem:[%s9 + $0xc] sm:$0xf]
        %v1279 = vld [vmem:[%s10] sm:$0x1]
        %v1281 = vperm.slane %v1279, 0
        %v1287 = vunpack.c.l.b16 %v1275
        %v1288 = vunpack.c.l.b16 %v1276
        %v1289 = vunpack.c.l.b16 %v1277
        %v1290 = vunpack.c.l.b16 %v1278
        %v1291 = vpack.c.b16 %v1288, %v1287
        %v1292 = vpack.c.b16 %v1290, %v1289
        %v1296 = vsel %vm935, %v1273, 0
        %v1299 = vsel %vm935, %v1274, 0
        %1301 = vmatpush.bf16.msra.mxu0 0
        %1302 = vmatpush.bf16.msra.mxu0 0
        %1303 = vmatpush.bf16.msra.mxu0 0
        %1304 = vmatpush.bf16.msra.mxu0 0
        %1305 = vmatpush.bf16.msra.mxu0 0
        %1306 = vmatpush.bf16.msra.mxu0 0
        %1307 = vmatpush.bf16.msra.mxu0 %v1292
        %1308 = vmatpush.bf16.msra.mxu0 %v1291
        %1309 = vmatmul.bf16.gmra.mxu0 %v1296
        %v1310 = vpop.f32.mrf.mxu0
        %v1311 = vadd.f32 %v1281, %v1310
        %v1312 = vpop.f32.mrf.mxu0
        %v1313 = vadd.f32 %v1281, %v1312
        %1314 = vmatmul.bf16.gmra.mxu0 %v1299
        %v1315 = vpop.f32.mrf.mxu0
        %v1316 = vadd.f32 %v1281, %v1315
        %v1317 = vpop.f32.mrf.mxu0
        %v1318 = vadd.f32 %v1281, %v1317
        %1319 = vdwg.mxu0
        %v1320 = vmax.f32 %v1311, 0.0
        %v1321 = vmax.f32 %v1313, 0.0
        %v1322 = vmax.f32 %v1316, 0.0
        %v1323 = vmax.f32 %v1318, 0.0
        %v1324 = vadd.s32 %v634, 8
        %v1325 = vadd.s32 %v634, 16
        %v1326 = vadd.s32 %v634, 24
        %vm1327 = vcmp.lt.s32.totalorder %v634, 14
        %vm1328 = vcmp.lt.s32.totalorder %v1324, 14
        %vm1329 = vcmp.lt.s32.totalorder %v1325, 14
        %vm1330 = vcmp.lt.s32.totalorder %v1326, 14
        %v1331 = vsel %vm1327, 1, 0
        %v1332 = vsel %vm1328, 1, 0
        %v1333 = vsel %vm1329, 1, 0
        %v1334 = vsel %vm1330, 1, 0
        %v1335 = vcvt.s32.f32 %v1331
        %v1336 = vcvt.s32.f32 %v1332
        %v1337 = vcvt.s32.f32 %v1333
        %v1338 = vcvt.s32.f32 %v1334
        %v1339 = vmul.f32 %v1320, %v1335
        %v1340 = vmul.f32 %v1321, %v1336
        %v1341 = vmul.f32 %v1322, %v1337
        %v1342 = vmul.f32 %v1323, %v1338
        %v1343 = vadd.f32 %v1339, %v1340
        %v1344 = vadd.f32 %v1343, %v1341
        %v1345 = vadd.f32 %v1344, %v1342
        %v1346 = vrot.slane %v1345, 4
        %v1347 = vadd.f32 %v1345, %v1346
        %v1348 = vrot.slane %v1347, 2
        %v1349 = vadd.f32 %v1347, %v1348
        %v1350 = vrot.slane %v1349, 1
        %v1351 = vadd.f32 %v1349, %v1350
        %v1352 = vmul.f32 %v1351, 0.071428575
        %v1353 = vsub.f32 %v1320, %v1352
        %v1354 = vsub.f32 %v1321, %v1352
        %v1355 = vsub.f32 %v1322, %v1352
        %v1356 = vsub.f32 %v1323, %v1352
        %v1357 = vmul.f32 %v1353, %v1335
        %v1358 = vmul.f32 %v1354, %v1336
        %v1359 = vmul.f32 %v1355, %v1337
        %v1360 = vmul.f32 %v1356, %v1338
        %v1361 = vmul.f32 %v1357, %v1357
        %v1362 = vmul.f32 %v1358, %v1358
        %v1363 = vmul.f32 %v1359, %v1359
        %v1364 = vmul.f32 %v1360, %v1360
        %v1365 = vadd.f32 %v1361, %v1362
        %v1366 = vadd.f32 %v1365, %v1363
        %v1367 = vadd.f32 %v1366, %v1364
        %v1368 = vrot.slane %v1367, 4
        %v1369 = vadd.f32 %v1367, %v1368
        %v1370 = vrot.slane %v1369, 2
        %v1371 = vadd.f32 %v1369, %v1370
        %v1372 = vrot.slane %v1371, 1
        %v1373 = vadd.f32 %v1371, %v1372
        %v1374 = vmul.f32 %v1373, 0.07692308
        %v1375 = vmax.f32 %v1374, 0.0
        %v1376 = vrsqrt.pop %v1375
        %v1377 = vmul.f32 %v1376, %v1375
        %v1378 = vmul.f32 %v1377, %v1376
        %v1379 = vmul.f32 0.5, %v1378
        %v1380 = vsub.f32 1.5, %v1379
        %v1381 = vmul.f32 %v1376, %v1380
        %v1382 = vmul.f32 %v1375, %v1381
        %vm1383 = vcmp.eq.f32.partialorder %v1375, inf
        %v1384 = vsel %vm1383, %v1375, %v1382
        %vm1385 = vcmp.eq.f32.partialorder %v1375, 0.0
        %v1386 = vand.u32 %v1375, 2147483648
        %v1387 = vsel %vm1385, %v1386, %v1384
        %v1388 = vpack.c.bf16 %v1352, %v1352
        %v1389 = vld [vmem:[%s11] sm:$0xf]
        %v1390 = vld [vmem:[%s11 + $0x4] sm:$0xf]
        %v1391 = vld [vmem:[%s11 + $0x8] sm:$0xf]
        %v1392 = vld [vmem:[%s11 + $0xc] sm:$0xf]
        %v1393 = vld [vmem:[%s11 + $0x10] sm:$0xf]
        %v1394 = vld [vmem:[%s11 + $0x14] sm:$0xf]
        %v1395 = vld [vmem:[%s11 + $0x18] sm:$0xf]
        %v1396 = vld [vmem:[%s11 + $0x1c] sm:$0xf]
        %v1397 = vld [vmem:[%s11 + $0x20] sm:$0xf]
        %v1398 = vld [vmem:[%s11 + $0x24] sm:$0xf]
        %v1399 = vld [vmem:[%s11 + $0x28] sm:$0xf]
        %v1400 = vld [vmem:[%s11 + $0x2c] sm:$0xf]
        %v1401 = vld [vmem:[%s11 + $0x30] sm:$0xf]
        %v1402 = vld [vmem:[%s11 + $0x34] sm:$0xf]
        %v1403 = vld [vmem:[%s11 + $0x38] sm:$0xf]
        %v1404 = vld [vmem:[%s11 + $0x3c] sm:$0xf]
        %v1405 = vpack.c.bf16 %v1387, %v1387
        %v1406 = vld [vmem:[%s12] sm:$0xf]
        %v1407 = vld [vmem:[%s12 + $0x4] sm:$0xf]
        %v1408 = vld [vmem:[%s12 + $0x8] sm:$0xf]
        %v1409 = vld [vmem:[%s12 + $0xc] sm:$0xf]
        %v1410 = vld [vmem:[%s12 + $0x10] sm:$0xf]
        %v1411 = vld [vmem:[%s12 + $0x14] sm:$0xf]
        %v1412 = vld [vmem:[%s12 + $0x18] sm:$0xf]
        %v1413 = vld [vmem:[%s12 + $0x1c] sm:$0xf]
        %v1414 = vld [vmem:[%s12 + $0x20] sm:$0xf]
        %v1415 = vld [vmem:[%s12 + $0x24] sm:$0xf]
        %v1416 = vld [vmem:[%s12 + $0x28] sm:$0xf]
        %v1417 = vld [vmem:[%s12 + $0x2c] sm:$0xf]
        %v1418 = vld [vmem:[%s12 + $0x30] sm:$0xf]
        %v1419 = vld [vmem:[%s12 + $0x34] sm:$0xf]
        %v1420 = vld [vmem:[%s12 + $0x38] sm:$0xf]
        %v1421 = vld [vmem:[%s12 + $0x3c] sm:$0xf]
        %v1438 = vunpack.c.l.b16 %v1406
        %v1439 = vunpack.c.l.b16 %v1407
        %v1440 = vunpack.c.l.b16 %v1408
        %v1441 = vunpack.c.l.b16 %v1409
        %v1442 = vunpack.c.l.b16 %v1410
        %v1443 = vunpack.c.l.b16 %v1411
        %v1444 = vunpack.c.l.b16 %v1412
        %v1445 = vunpack.c.l.b16 %v1413
        %v1446 = vunpack.c.l.b16 %v1414
        %v1447 = vunpack.c.l.b16 %v1415
        %v1448 = vunpack.c.l.b16 %v1416
        %v1449 = vunpack.c.l.b16 %v1417
        %v1450 = vunpack.c.l.b16 %v1418
        %v1451 = vunpack.c.l.b16 %v1419
        %v1452 = vunpack.c.l.b16 %v1420
        %v1453 = vunpack.c.l.b16 %v1421
        %v1454 = vpack.c.b16 %v1439, %v1438
        %v1455 = vpack.c.b16 %v1441, %v1440
        %v1456 = vpack.c.b16 %v1443, %v1442
        %v1457 = vpack.c.b16 %v1445, %v1444
        %v1458 = vpack.c.b16 %v1447, %v1446
        %v1459 = vpack.c.b16 %v1449, %v1448
        %v1460 = vpack.c.b16 %v1451, %v1450
        %v1461 = vpack.c.b16 %v1453, %v1452
        %1470 = vmatpush.bf16.msra.mxu0 %v1461
        %1471 = vmatpush.bf16.msra.mxu0 %v1460
        %1472 = vmatpush.bf16.msra.mxu0 %v1459
        %1473 = vmatpush.bf16.msra.mxu0 %v1458
        %1474 = vmatpush.bf16.msra.mxu0 %v1457
        %1475 = vmatpush.bf16.msra.mxu0 %v1456
        %1476 = vmatpush.bf16.msra.mxu0 %v1455
        %1477 = vmatpush.bf16.msra.mxu0 %v1454
        %1478 = vmatmul.bf16.gmra.mxu0 %v1405
        %v1479 = vpop.f32.mrf.mxu0
        %v1480 = vadd.f32 0.0, %v1479
        %v1481 = vpop.f32.mrf.mxu0
        %1482 = vdwg.mxu0
        %v1499 = vunpack.c.l.b16 %v1389
        %v1500 = vunpack.c.l.b16 %v1390
        %v1501 = vunpack.c.l.b16 %v1391
        %v1502 = vunpack.c.l.b16 %v1392
        %v1503 = vunpack.c.l.b16 %v1393
        %v1504 = vunpack.c.l.b16 %v1394
        %v1505 = vunpack.c.l.b16 %v1395
        %v1506 = vunpack.c.l.b16 %v1396
        %v1507 = vunpack.c.l.b16 %v1397
        %v1508 = vunpack.c.l.b16 %v1398
        %v1509 = vunpack.c.l.b16 %v1399
        %v1510 = vunpack.c.l.b16 %v1400
        %v1511 = vunpack.c.l.b16 %v1401
        %v1512 = vunpack.c.l.b16 %v1402
        %v1513 = vunpack.c.l.b16 %v1403
        %v1514 = vunpack.c.l.b16 %v1404
        %v1515 = vpack.c.b16 %v1500, %v1499
        %v1516 = vpack.c.b16 %v1502, %v1501
        %v1517 = vpack.c.b16 %v1504, %v1503
        %v1518 = vpack.c.b16 %v1506, %v1505
        %v1519 = vpack.c.b16 %v1508, %v1507
        %v1520 = vpack.c.b16 %v1510, %v1509
        %v1521 = vpack.c.b16 %v1512, %v1511
        %v1522 = vpack.c.b16 %v1514, %v1513
        %1531 = vmatpush.bf16.msra.mxu0 %v1522
        %1532 = vmatpush.bf16.msra.mxu0 %v1521
        %1533 = vmatpush.bf16.msra.mxu0 %v1520
        %1534 = vmatpush.bf16.msra.mxu0 %v1519
        %1535 = vmatpush.bf16.msra.mxu0 %v1518
        %1536 = vmatpush.bf16.msra.mxu0 %v1517
        %1537 = vmatpush.bf16.msra.mxu0 %v1516
        %1538 = vmatpush.bf16.msra.mxu0 %v1515
        %1539 = vmatmul.bf16.gmra.mxu0 %v1388
        %v1540 = vpop.f32.mrf.mxu0
        %v1541 = vadd.f32 %v1480, %v1540
        %v1542 = vpop.f32.mrf.mxu0
        %1543 = vdwg.mxu0
        %v1544 = vld [vmem:[%s13] sm:$0x1]
        %v1545 = vadd.f32 %v1541, %v1544
        %v1546 = vmax.f32 %v1545, 0.0
        %v1547 = vpack.c.bf16 %v1546, %v1546
        %v1548 = vld [vmem:[%s14] sm:$0xf]
        %v1549 = vld [vmem:[%s14 + $0x4] sm:$0xf]
        %v1550 = vld [vmem:[%s14 + $0x8] sm:$0xf]
        %v1551 = vld [vmem:[%s14 + $0xc] sm:$0xf]
        %v1552 = vld [vmem:[%s15] sm:$0x1]
        %v1557 = vunpack.c.l.b16 %v1548
        %v1558 = vunpack.c.l.b16 %v1549
        %v1559 = vunpack.c.l.b16 %v1550
        %v1560 = vunpack.c.l.b16 %v1551
        %v1561 = vpack.c.b16 %v1558, %v1557
        %v1562 = vpack.c.b16 %v1560, %v1559
        %v1566 = vsel %vm935, %v1547, 0
        %1568 = vmatpush.bf16.msra.mxu0 0
        %1569 = vmatpush.bf16.msra.mxu0 0
        %1570 = vmatpush.bf16.msra.mxu0 0
        %1571 = vmatpush.bf16.msra.mxu0 0
        %1572 = vmatpush.bf16.msra.mxu0 0
        %1573 = vmatpush.bf16.msra.mxu0 0
        %1574 = vmatpush.bf16.msra.mxu0 %v1562
        %1575 = vmatpush.bf16.msra.mxu0 %v1561
        %1576 = vmatmul.bf16.gmra.mxu0 %v1566
        %v1577 = vpop.f32.mrf.mxu0
        %v1578 = vadd.f32 %v1552, %v1577
        %v1579 = vpop.f32.mrf.mxu0
        %1580 = vdwg.mxu0
        %v1581 = vmax.f32 %v1578, 0.0
        %v1582 = vpack.c.bf16 %v1581, %v1581
        %v1583 = vld [vmem:[%s16] sm:$0xf]
        %v1584 = vld [vmem:[%s16 + $0x4] sm:$0xf]
        %v1585 = vld [vmem:[%s16 + $0x8] sm:$0xf]
        %v1586 = vld [vmem:[%s16 + $0xc] sm:$0xf]
        %v1587 = vld [vmem:[%s17] sm:$0x1]
        %v1592 = vunpack.c.l.b16 %v1583
        %v1593 = vunpack.c.l.b16 %v1584
        %v1594 = vunpack.c.l.b16 %v1585
        %v1595 = vunpack.c.l.b16 %v1586
        %v1596 = vpack.c.b16 %v1593, %v1592
        %v1597 = vpack.c.b16 %v1595, %v1594
        %v1601 = vsel %vm935, %v1582, 0
        %1603 = vmatpush.bf16.msra.mxu0 0
        %1604 = vmatpush.bf16.msra.mxu0 0
        %1605 = vmatpush.bf16.msra.mxu0 0
        %1606 = vmatpush.bf16.msra.mxu0 0
        %1607 = vmatpush.bf16.msra.mxu0 0
        %1608 = vmatpush.bf16.msra.mxu0 0
        %1609 = vmatpush.bf16.msra.mxu0 %v1597
        %1610 = vmatpush.bf16.msra.mxu0 %v1596
        %1611 = vmatmul.bf16.gmra.mxu0 %v1601
        %v1612 = vpop.f32.mrf.mxu0
        %v1613 = vadd.f32 %v1587, %v1612
        %v1614 = vpop.f32.mrf.mxu0
        %1615 = vdwg.mxu0
        %1616 = vst [vmem:[%s612] sm:$0x1] %v1613
        %s1617 = sand.u32 %s425, 1
        %s1618 = scalar_lea.sflag [#allocation4], %s1617
        %s1619 = sand.u32 %s425, 1
        %s1620 = scalar_lea.vmem [#allocation8], %s1619
        // Predicated region
        $region105: #{tpu_custom_call.1} parent=91 // pred_check
          %p1621 = pneg %p435
        $region106: #{tpu_custom_call.1} parent=91 // pred_check_branch
          %1623 = sbr.rel (%p1621) target = $region108
        $region107: #{tpu_custom_call.1} parent=91 // pred_region
          %1625 = vsyncadd %s1618, 0
          %s1626 = scalar_lea.hbm %s18, %s34
          %s1628 = sshll.u32 %s1620, 4
          %s1629 = int_to_ptr.vmem [resolvable:$true] %s1628
          %s1630 = sshll.u32 %s1626, 4
          %s1631 = int_to_ptr.hbm [resolvable:$true] %s1630
          %1633 = dma.vmem_to_hbm [thread:$0]  %s1629, 16, %s1631, %s1618
        $region108: #{tpu_custom_call.1} parent=91 // pred_fallthru
          _
      $region92: #{tpu_custom_call.1} parent=5 // pred_fallthru
        _
      %p1634 = scmp.le.s32.totalorder 2, %s29
      // Predicated region
      $region109: #{tpu_custom_call.1} parent=5 // pred_check
        %p1635 = pneg %p1634
      $region110: #{tpu_custom_call.1} parent=5 // pred_check_branch
        %1637 = sbr.rel (%p1635) target = $region112
      $region111: #{tpu_custom_call.1} parent=5 // pred_region
        %s1638 = ssub.s32 %s29, 2
        // Predicated region
        $region113: #{tpu_custom_call.1} parent=111 // pred_check
          %p1639 = pneg %p441
        $region114: #{tpu_custom_call.1} parent=111 // pred_check_branch
          %1641 = sbr.rel (%p1639) target = $region116
        $region115: #{tpu_custom_call.1} parent=111 // pred_region
          %s1642 = sand.u32 %s426, 1
          %s1643 = scalar_lea.sflag [#allocation4], %s1642
          %s1644 = sand.u32 %s426, 1
          %s1645 = scalar_lea.vmem [#allocation8], %s1644
          %1647 = dma.done %s1643, 16
        $region116: #{tpu_custom_call.1} parent=111 // pred_fallthru
          _
      $region112: #{tpu_custom_call.1} parent=5 // pred_fallthru
        _
    $region6: #{tpu_custom_call.1} parent=1 // loop_footer
      %s33 = sadd.s32 1, %s29
    $region7: #{tpu_custom_call.1} parent=1 // loop_footer_branch
      %28 = sbr.rel target = $region3
    $region8: #{tpu_custom_call.1} parent=1 // loop_exit
      _
    %1648 = vsyncpa [#allocation3], 1
    %s1649 = scalar_lea.sflag [#allocation3], 1
    %1650 = vsyncpa %s1649, 1
    %1651 = vsyncpa [#allocation6], 1
    %1652 = vsyncpa [#allocation4], 1
    %s1653 = scalar_lea.sflag [#allocation4], 1
    %1654 = vsyncpa %s1653, 1

</llo_original>
